<compile_context>
chip_gen: v7x
topology: tpu7x:2x2x1
jax: 0.10.0
libtpu: 0.0.40
codegen_flags: <defaults>
</compile_context>

<pallas_src>
import math
import functools

import jax
import jax.numpy as jnp
from jax.experimental import pallas as pl
from jax.experimental.pallas import tpu as pltpu

BN_EPS = 1e-5


# ----------------------------------------------------------------------------
# Static geometry helpers (mirror TimeDelayLayer_v1.get_kernel_width /
# get_valid_steps exactly).
# ----------------------------------------------------------------------------
def _expand_context(context, full_context):
    assert context[0] <= context[-1], "context must be ordered"
    return list(range(context[0], context[-1] + 1)) if full_context else list(context)


def _layer_geometry(context, t_in):
    """Returns (offsets, t_out): time index of output step c, tap k is offsets[k] + c."""
    c_first, c_last = context[0], context[-1]
    start = 0 if c_first >= 0 else -c_first
    end = t_in if c_last <= 0 else t_in - c_last
    return tuple(int(c) + start for c in context), end - start


def _round_up(n, m):
    return ((n + m - 1) // m) * m


def _plan_geometry(contexts, t0):
    """Per-layer (offsets, true t_out) plus 8-aligned padded row counts.

    rows[i] is the (sublane-aligned) number of rows computed for layer i; it is chosen
    backwards so that every im2col slice of the previous layer's (padded) output stays
    in bounds.  Padded rows only ever feed padded rows; valid rows only read valid rows.
    """
    geoms = []
    t_in = t0
    for ctx in contexts:
        offs, t_out = _layer_geometry(ctx, t_in)
        geoms.append((offs, t_out))
        t_in = t_out
    n = len(geoms)
    rows = [0] * n
    rows[n - 1] = _round_up(geoms[n - 1][1], 8)
    for i in range(n - 1, 0, -1):
        need = geoms[i][0][-1] + rows[i]
        rows[i - 1] = _round_up(max(geoms[i - 1][1], need), 8)
    rows_in = _round_up(max(t0, geoms[0][0][-1] + rows[0]), 8)
    return geoms, rows, rows_in


# ----------------------------------------------------------------------------
# The fused kernel: TDNN stack + pooling + dense head, single grid step.
# ----------------------------------------------------------------------------
def _make_fused_kernel(layer_plan, batch, t_final):
    """layer_plan: tuple of (offsets, padded_rows) per TDNN layer (static Python ints)."""
    n_layers = len(layer_plan)

    def kernel(*refs):
        x_ref = refs[0]
        frame_refs = [(refs[1 + 2 * i], refs[2 + 2 * i]) for i in range(n_layers)]
        base = 1 + 2 * n_layers
        w1_ref, t1_ref, w2_ref, t2_ref, w3_ref, b3_ref = refs[base:base + 6]
        xvec_ref, logits_ref = refs[base + 6], refs[base + 7]

        a = x_ref[...]                                     # (B*rows_in, Cin_pad) bf16
        rows_prev = a.shape[0] // batch
        for li, (offsets, rows_out) in enumerate(layer_plan):
            w_ref, t_ref = frame_refs[li]
            # im2col in bf16: one matmul per layer, batch folded into the M rows.
            parts = []
            for b in range(batch):
                o0 = b * rows_prev
                taps = [a[o0 + o:o0 + o + rows_out, :] for o in offsets]
                parts.append(taps[0] if len(taps) == 1
                             else jnp.concatenate(taps, axis=1))
            lhs = parts[0] if batch == 1 else jnp.concatenate(parts, axis=0)
            acc = jnp.dot(lhs, w_ref[...], preferred_element_type=jnp.float32)
            # conv bias & eval-mode BN already folded into w / shift -> just add + ReLU.
            y = jnp.maximum(acc + t_ref[...], 0.0)
            # keep intermediates bf16; final TDNN output stays f32 for pooling stats.
            a = y if li == n_layers - 1 else y.astype(jnp.bfloat16)
            rows_prev = rows_out

        # statistic pooling over the valid frames: mean + unbiased std (torch.std default).
        pooled = []
        for b in range(batch):
            yb = a[b * rows_prev:b * rows_prev + t_final, :]          # (t_final, C5) f32
            mean = jnp.mean(yb, axis=0, keepdims=True)
            cen = yb - mean
            var = jnp.sum(cen * cen, axis=0, keepdims=True) / (t_final - 1)
            pooled.append(jnp.concatenate([mean, jnp.sqrt(var)], axis=1))
        p = pooled[0] if batch == 1 else jnp.concatenate(pooled, axis=0)   # (B, 2*C5)

        # fc1 -> bn6 -> relu (x-vectors), fc2 -> bn7 -> relu, fc3 (logits).
        h1 = jnp.maximum(
            jnp.dot(p.astype(jnp.bfloat16), w1_ref[...],
                    preferred_element_type=jnp.float32) + t1_ref[...], 0.0)
        xvec_ref[...] = h1
        h2 = jnp.maximum(
            jnp.dot(h1.astype(jnp.bfloat16), w2_ref[...],
                    preferred_element_type=jnp.float32) + t2_ref[...], 0.0)
        logits_ref[...] = jnp.dot(h2.astype(jnp.bfloat16), w3_ref[...],
                                  preferred_element_type=jnp.float32) + b3_ref[...]

    return kernel


# ----------------------------------------------------------------------------
# Full forward.
# ----------------------------------------------------------------------------
def tdnn_v1_forward(params, x):
    """x: (B, input_dim, T) or (B, 1, input_dim, T).  Returns (logits, x_vectors)."""
    if x.ndim == 4:
        x = jnp.squeeze(x, axis=1)
    B, cin, T0 = x.shape
    contexts = [f["context"] for f in params["frames"]]
    geoms, rows, rows_in = _plan_geometry(contexts, T0)
    t_final = geoms[-1][1]
    assert t_final >= 2, "need >=2 valid frames for the unbiased std (divisor T-1)"

    cinp = params["cin_pad"]
    x = jnp.transpose(x, (0, 2, 1)).astype(jnp.float32)             # (B, T0, Cin)
    x = jnp.pad(x, ((0, 0), (0, rows_in - T0), (0, cinp - cin)))    # zero rows / lanes
    x2d = x.reshape(B * rows_in, cinp).astype(jnp.bfloat16)         # MXU operand dtype

    args = [x2d]
    for f in params["frames"]:
        args += [f["w"], f["shift"]]
    args += [params["fc1"]["w"], params["fc1"]["shift"],
             params["fc2"]["w"], params["fc2"]["shift"],
             params["fc3"]["w"], params["fc3"]["b"]]

    c6 = params["fc1"]["w"].shape[1]
    n_out = params["fc3"]["w"].shape[1]

    # Explicit VMEM budget: params/IO + im2col LHS + per-layer activations, 2x slack.
    act_bytes = 0
    cin_prev = cinp
    for (offs, _), r, f in zip(geoms, rows, params["frames"]):
        cout = int(f["w"].shape[1])
        act_bytes += B * r * (len(offs) * cin_prev * 2 + cout * 4)
        cin_prev = cout
    io_bytes = sum(int(a.size) * a.dtype.itemsize for a in args)
    vmem_limit = int(min(max(2 * (io_bytes + act_bytes) + (2 << 20), 16 << 20), 48 << 20))

    kernel = _make_fused_kernel(
        tuple((offs, r) for (offs, _), r in zip(geoms, rows)), B, t_final)

    xvec, logits = pl.pallas_call(
        kernel,
        out_shape=(jax.ShapeDtypeStruct((B, c6), jnp.float32),
                   jax.ShapeDtypeStruct((B, n_out), jnp.float32)),
        grid=(1,),
        in_specs=[pl.BlockSpec(a.shape, lambda i: (0, 0)) for a in args],
        out_specs=(pl.BlockSpec((B, c6), lambda i: (0, 0)),
                   pl.BlockSpec((B, n_out), lambda i: (0, 0))),
        compiler_params=pltpu.CompilerParams(
            dimension_semantics=("arbitrary",),
            vmem_limit_bytes=vmem_limit),
    )(*args)
    return logits, xvec


# ----------------------------------------------------------------------------
# Parameter construction (matches the torch module's init distributions/shapes).
# BN(eval) scale is folded into the bf16 weights; the per-channel shift is bias*scale.
# For general running stats use: s = gamma/sqrt(var+eps); w *= s; shift = (bias-mean)*s+beta.
# ----------------------------------------------------------------------------
def init_tdnn_v1_params(key, *, context, full_context, input_dim, node_num, output_dim):
    assert node_num[5] == 2 * node_num[4], "fc1 in_features must equal 2*node_num[4]"
    keys = jax.random.split(key, 2 * len(context) + 3)
    bn_scale = 1.0 / math.sqrt(1.0 + BN_EPS)   # gamma=1, beta=0, mean=0, var=1, eval mode

    frames = []
    cin = input_dim
    cin_pad0 = _round_up(input_dim, 128)       # lane-pad the raw feature dim
    for li, (ctx, fc) in enumerate(zip(context, full_context)):
        ctx = _expand_context(ctx, fc)
        k = len(ctx)
        cout = node_num[li]
        stdv = 1.0 / math.sqrt(cin)            # TimeDelayLayer_v1: normal(0, 1/sqrt(Cin))
        w = jax.random.normal(keys[2 * li], (k, cin, cout), jnp.float32) * stdv
        bias = jax.random.normal(keys[2 * li + 1], (1, cout), jnp.float32) * stdv
        cin_pad = cin_pad0 if li == 0 else cin
        if cin_pad != cin:                     # zero weight rows for the padded input lanes
            w = jnp.pad(w, ((0, 0), (0, cin_pad - cin), (0, 0)))
        w_flat = (w.reshape(k * cin_pad, cout) * bn_scale).astype(jnp.bfloat16)  # im2col + BN fold
        frames.append(dict(w=w_flat, shift=bias * bn_scale, context=ctx))
        cin = cout

    def linear(kk, din, dout):                 # nn.Linear default init
        kw, kb = jax.random.split(kk)
        bound = 1.0 / math.sqrt(din)
        w = jax.random.uniform(kw, (din, dout), jnp.float32, -bound, bound)
        b = jax.random.uniform(kb, (1, dout), jnp.float32, -bound, bound)
        return w, b

    w1, b1 = linear(keys[-3], node_num[5], node_num[6])
    w2, b2 = linear(keys[-2], node_num[6], node_num[7])
    w3, b3 = linear(keys[-1], node_num[7], output_dim)
    return dict(
        frames=frames, cin=input_dim, cin_pad=cin_pad0,
        fc1=dict(w=(w1 * bn_scale).astype(jnp.bfloat16), shift=b1 * bn_scale),
        fc2=dict(w=(w2 * bn_scale).astype(jnp.bfloat16), shift=b2 * bn_scale),
        fc3=dict(w=w3.astype(jnp.bfloat16), b=b3),
    )


if __name__ == "__main__":
    # Canonical x-vector style TDNN_v1 config, scaled down to small test shapes.
    context = [[-2, 2], [-2, 0, 2], [-3, 0, 3], [0], [0]]
    full_context = [True, False, False, True, True]
    input_dim = 24
    node_num = [128, 128, 128, 128, 256, 512, 128, 128]   # node_num[5] == 2*node_num[4]
    output_dim = 16                                        # number of classes
    B, T = 2, 32                                           # frame counts: 32->28->24->18->18->18

    key = jax.random.PRNGKey(0)
    pkey, xkey = jax.random.split(key)
    params = init_tdnn_v1_params(
        pkey, context=context, full_context=full_context, input_dim=input_dim,
        node_num=node_num, output_dim=output_dim)
    x = jax.random.normal(xkey, (B, input_dim, T), jnp.float32)

    fwd = jax.jit(functools.partial(tdnn_v1_forward, params))
    logits, xvec = fwd(x)
    jax.block_until_ready((logits, xvec))

    assert logits.shape == (B, output_dim), logits.shape
    assert xvec.shape == (B, node_num[6]), xvec.shape
    assert bool(jnp.all(jnp.isfinite(logits))) and bool(jnp.all(jnp.isfinite(xvec)))
    print("KERNEL_OK")
</pallas_src>

<mosaic_0001>
module attributes {stable_mosaic.version = 11 : i64} {
  func.func @kernel(%arg0: i32, %arg1: memref<96x128xbf16, #tpu.memory_space<vmem>>, %arg2: memref<640x128xbf16, #tpu.memory_space<vmem>>, %arg3: memref<1x128xf32, #tpu.memory_space<vmem>>, %arg4: memref<384x128xbf16, #tpu.memory_space<vmem>>, %arg5: memref<1x128xf32, #tpu.memory_space<vmem>>, %arg6: memref<384x128xbf16, #tpu.memory_space<vmem>>, %arg7: memref<1x128xf32, #tpu.memory_space<vmem>>, %arg8: memref<128x128xbf16, #tpu.memory_space<vmem>>, %arg9: memref<1x128xf32, #tpu.memory_space<vmem>>, %arg10: memref<128x256xbf16, #tpu.memory_space<vmem>>, %arg11: memref<1x256xf32, #tpu.memory_space<vmem>>, %arg12: memref<512x128xbf16, #tpu.memory_space<vmem>>, %arg13: memref<1x128xf32, #tpu.memory_space<vmem>>, %arg14: memref<128x128xbf16, #tpu.memory_space<vmem>>, %arg15: memref<1x128xf32, #tpu.memory_space<vmem>>, %arg16: memref<128x16xbf16, #tpu.memory_space<vmem>>, %arg17: memref<1x16xf32, #tpu.memory_space<vmem>>, %arg18: memref<2x128xf32, #tpu.memory_space<vmem>>, %arg19: memref<2x16xf32, #tpu.memory_space<vmem>>) attributes {dimension_semantics = [#tpu.dimension_semantics<arbitrary>], iteration_bounds = array<i64: 1>, scalar_prefetch = 0 : i64, scratch_operands = 0 : i64, tpu.core_type = #tpu.core_type<tc>, window_params = [{pipeline_mode = #tpu.pipeline_mode<synchronous>, transform_indices = @transform_0, window_bounds = array<i64: 96, 128>}, {pipeline_mode = #tpu.pipeline_mode<synchronous>, transform_indices = @transform_1, window_bounds = array<i64: 640, 128>}, {pipeline_mode = #tpu.pipeline_mode<synchronous>, transform_indices = @transform_2, window_bounds = array<i64: 1, 128>}, {pipeline_mode = #tpu.pipeline_mode<synchronous>, transform_indices = @transform_3, window_bounds = array<i64: 384, 128>}, {pipeline_mode = #tpu.pipeline_mode<synchronous>, transform_indices = @transform_4, window_bounds = array<i64: 1, 128>}, {pipeline_mode = #tpu.pipeline_mode<synchronous>, transform_indices = @transform_5, window_bounds = array<i64: 384, 128>}, {pipeline_mode = #tpu.pipeline_mode<synchronous>, transform_indices = @transform_6, window_bounds = array<i64: 1, 128>}, {pipeline_mode = #tpu.pipeline_mode<synchronous>, transform_indices = @transform_7, window_bounds = array<i64: 128, 128>}, {pipeline_mode = #tpu.pipeline_mode<synchronous>, transform_indices = @transform_8, window_bounds = array<i64: 1, 128>}, {pipeline_mode = #tpu.pipeline_mode<synchronous>, transform_indices = @transform_9, window_bounds = array<i64: 128, 256>}, {pipeline_mode = #tpu.pipeline_mode<synchronous>, transform_indices = @transform_10, window_bounds = array<i64: 1, 256>}, {pipeline_mode = #tpu.pipeline_mode<synchronous>, transform_indices = @transform_11, window_bounds = array<i64: 512, 128>}, {pipeline_mode = #tpu.pipeline_mode<synchronous>, transform_indices = @transform_12, window_bounds = array<i64: 1, 128>}, {pipeline_mode = #tpu.pipeline_mode<synchronous>, transform_indices = @transform_13, window_bounds = array<i64: 128, 128>}, {pipeline_mode = #tpu.pipeline_mode<synchronous>, transform_indices = @transform_14, window_bounds = array<i64: 1, 128>}, {pipeline_mode = #tpu.pipeline_mode<synchronous>, transform_indices = @transform_15, window_bounds = array<i64: 128, 16>}, {pipeline_mode = #tpu.pipeline_mode<synchronous>, transform_indices = @transform_16, window_bounds = array<i64: 1, 16>}, {pipeline_mode = #tpu.pipeline_mode<synchronous>, transform_indices = @transform_17, window_bounds = array<i64: 2, 128>}, {pipeline_mode = #tpu.pipeline_mode<synchronous>, transform_indices = @transform_18, window_bounds = array<i64: 2, 16>}]} {
    %c0 = arith.constant 0 : index
    %c0_0 = arith.constant 0 : index
    %0 = vector.load %arg1[%c0, %c0_0] : memref<96x128xbf16, #tpu.memory_space<vmem>>, vector<96x128xbf16>
    %1 = vector.extract_strided_slice %0 {offsets = [0, 0], sizes = [40, 128], strides = [1, 1]} : vector<96x128xbf16> to vector<40x128xbf16>
    %2 = vector.extract_strided_slice %0 {offsets = [1, 0], sizes = [40, 128], strides = [1, 1]} : vector<96x128xbf16> to vector<40x128xbf16>
    %3 = vector.extract_strided_slice %0 {offsets = [2, 0], sizes = [40, 128], strides = [1, 1]} : vector<96x128xbf16> to vector<40x128xbf16>
    %4 = vector.extract_strided_slice %0 {offsets = [3, 0], sizes = [40, 128], strides = [1, 1]} : vector<96x128xbf16> to vector<40x128xbf16>
    %5 = vector.extract_strided_slice %0 {offsets = [4, 0], sizes = [40, 128], strides = [1, 1]} : vector<96x128xbf16> to vector<40x128xbf16>
    %6 = tpu.concatenate %1, %2, %3, %4, %5 in 1 : vector<40x128xbf16>, vector<40x128xbf16>, vector<40x128xbf16>, vector<40x128xbf16>, vector<40x128xbf16> -> vector<40x640xbf16>
    %7 = vector.extract_strided_slice %0 {offsets = [48, 0], sizes = [40, 128], strides = [1, 1]} : vector<96x128xbf16> to vector<40x128xbf16>
    %8 = vector.extract_strided_slice %0 {offsets = [49, 0], sizes = [40, 128], strides = [1, 1]} : vector<96x128xbf16> to vector<40x128xbf16>
    %9 = vector.extract_strided_slice %0 {offsets = [50, 0], sizes = [40, 128], strides = [1, 1]} : vector<96x128xbf16> to vector<40x128xbf16>
    %10 = vector.extract_strided_slice %0 {offsets = [51, 0], sizes = [40, 128], strides = [1, 1]} : vector<96x128xbf16> to vector<40x128xbf16>
    %11 = vector.extract_strided_slice %0 {offsets = [52, 0], sizes = [40, 128], strides = [1, 1]} : vector<96x128xbf16> to vector<40x128xbf16>
    %12 = tpu.concatenate %7, %8, %9, %10, %11 in 1 : vector<40x128xbf16>, vector<40x128xbf16>, vector<40x128xbf16>, vector<40x128xbf16>, vector<40x128xbf16> -> vector<40x640xbf16>
    %13 = tpu.concatenate %6, %12 in 0 : vector<40x640xbf16>, vector<40x640xbf16> -> vector<80x640xbf16>
    %c0_1 = arith.constant 0 : index
    %c0_2 = arith.constant 0 : index
    %14 = vector.load %arg2[%c0_1, %c0_2] : memref<640x128xbf16, #tpu.memory_space<vmem>>, vector<640x128xbf16>
    %cst = arith.constant dense<0.000000e+00> : vector<80x128xf32>
    %15 = tpu.matmul %13, %14, %cst {dimension_numbers = #tpu.dot_dimension_numbers<[1], [0], [0], [1], [0, 0, 1, 1], [], []>} : vector<80x640xbf16>, vector<640x128xbf16>, vector<80x128xf32> -> vector<80x128xf32>
    %c0_3 = arith.constant 0 : index
    %c0_4 = arith.constant 0 : index
    %16 = vector.load %arg3[%c0_3, %c0_4] : memref<1x128xf32, #tpu.memory_space<vmem>>, vector<1x128xf32>
    %17 = vector.broadcast %16 : vector<1x128xf32> to vector<80x128xf32>
    %18 = arith.addf %15, %17 : vector<80x128xf32>
    %cst_5 = arith.constant 0.000000e+00 : f32
    %19 = vector.broadcast %cst_5 : f32 to vector<80x128xf32>
    %20 = arith.maximumf %18, %19 : vector<80x128xf32>
    %21 = arith.truncf %20 : vector<80x128xf32> to vector<80x128xbf16>
    %22 = vector.extract_strided_slice %21 {offsets = [0, 0], sizes = [32, 128], strides = [1, 1]} : vector<80x128xbf16> to vector<32x128xbf16>
    %23 = vector.extract_strided_slice %21 {offsets = [2, 0], sizes = [32, 128], strides = [1, 1]} : vector<80x128xbf16> to vector<32x128xbf16>
    %24 = vector.extract_strided_slice %21 {offsets = [4, 0], sizes = [32, 128], strides = [1, 1]} : vector<80x128xbf16> to vector<32x128xbf16>
    %25 = tpu.concatenate %22, %23, %24 in 1 : vector<32x128xbf16>, vector<32x128xbf16>, vector<32x128xbf16> -> vector<32x384xbf16>
    %26 = vector.extract_strided_slice %21 {offsets = [40, 0], sizes = [32, 128], strides = [1, 1]} : vector<80x128xbf16> to vector<32x128xbf16>
    %27 = vector.extract_strided_slice %21 {offsets = [42, 0], sizes = [32, 128], strides = [1, 1]} : vector<80x128xbf16> to vector<32x128xbf16>
    %28 = vector.extract_strided_slice %21 {offsets = [44, 0], sizes = [32, 128], strides = [1, 1]} : vector<80x128xbf16> to vector<32x128xbf16>
    %29 = tpu.concatenate %26, %27, %28 in 1 : vector<32x128xbf16>, vector<32x128xbf16>, vector<32x128xbf16> -> vector<32x384xbf16>
    %30 = tpu.concatenate %25, %29 in 0 : vector<32x384xbf16>, vector<32x384xbf16> -> vector<64x384xbf16>
    %c0_6 = arith.constant 0 : index
    %c0_7 = arith.constant 0 : index
    %31 = vector.load %arg4[%c0_6, %c0_7] : memref<384x128xbf16, #tpu.memory_space<vmem>>, vector<384x128xbf16>
    %cst_8 = arith.constant dense<0.000000e+00> : vector<64x128xf32>
    %32 = tpu.matmul %30, %31, %cst_8 {dimension_numbers = #tpu.dot_dimension_numbers<[1], [0], [0], [1], [0, 0, 1, 1], [], []>} : vector<64x384xbf16>, vector<384x128xbf16>, vector<64x128xf32> -> vector<64x128xf32>
    %c0_9 = arith.constant 0 : index
    %c0_10 = arith.constant 0 : index
    %33 = vector.load %arg5[%c0_9, %c0_10] : memref<1x128xf32, #tpu.memory_space<vmem>>, vector<1x128xf32>
    %34 = vector.broadcast %33 : vector<1x128xf32> to vector<64x128xf32>
    %35 = arith.addf %32, %34 : vector<64x128xf32>
    %cst_11 = arith.constant 0.000000e+00 : f32
    %36 = vector.broadcast %cst_11 : f32 to vector<64x128xf32>
    %37 = arith.maximumf %35, %36 : vector<64x128xf32>
    %38 = arith.truncf %37 : vector<64x128xf32> to vector<64x128xbf16>
    %39 = vector.extract_strided_slice %38 {offsets = [0, 0], sizes = [24, 128], strides = [1, 1]} : vector<64x128xbf16> to vector<24x128xbf16>
    %40 = vector.extract_strided_slice %38 {offsets = [3, 0], sizes = [24, 128], strides = [1, 1]} : vector<64x128xbf16> to vector<24x128xbf16>
    %41 = vector.extract_strided_slice %38 {offsets = [6, 0], sizes = [24, 128], strides = [1, 1]} : vector<64x128xbf16> to vector<24x128xbf16>
    %42 = tpu.concatenate %39, %40, %41 in 1 : vector<24x128xbf16>, vector<24x128xbf16>, vector<24x128xbf16> -> vector<24x384xbf16>
    %43 = vector.extract_strided_slice %38 {offsets = [32, 0], sizes = [24, 128], strides = [1, 1]} : vector<64x128xbf16> to vector<24x128xbf16>
    %44 = vector.extract_strided_slice %38 {offsets = [35, 0], sizes = [24, 128], strides = [1, 1]} : vector<64x128xbf16> to vector<24x128xbf16>
    %45 = vector.extract_strided_slice %38 {offsets = [38, 0], sizes = [24, 128], strides = [1, 1]} : vector<64x128xbf16> to vector<24x128xbf16>
    %46 = tpu.concatenate %43, %44, %45 in 1 : vector<24x128xbf16>, vector<24x128xbf16>, vector<24x128xbf16> -> vector<24x384xbf16>
    %47 = tpu.concatenate %42, %46 in 0 : vector<24x384xbf16>, vector<24x384xbf16> -> vector<48x384xbf16>
    %c0_12 = arith.constant 0 : index
    %c0_13 = arith.constant 0 : index
    %48 = vector.load %arg6[%c0_12, %c0_13] : memref<384x128xbf16, #tpu.memory_space<vmem>>, vector<384x128xbf16>
    %cst_14 = arith.constant dense<0.000000e+00> : vector<48x128xf32>
    %49 = tpu.matmul %47, %48, %cst_14 {dimension_numbers = #tpu.dot_dimension_numbers<[1], [0], [0], [1], [0, 0, 1, 1], [], []>} : vector<48x384xbf16>, vector<384x128xbf16>, vector<48x128xf32> -> vector<48x128xf32>
    %c0_15 = arith.constant 0 : index
    %c0_16 = arith.constant 0 : index
    %50 = vector.load %arg7[%c0_15, %c0_16] : memref<1x128xf32, #tpu.memory_space<vmem>>, vector<1x128xf32>
    %51 = vector.broadcast %50 : vector<1x128xf32> to vector<48x128xf32>
    %52 = arith.addf %49, %51 : vector<48x128xf32>
    %cst_17 = arith.constant 0.000000e+00 : f32
    %53 = vector.broadcast %cst_17 : f32 to vector<48x128xf32>
    %54 = arith.maximumf %52, %53 : vector<48x128xf32>
    %55 = arith.truncf %54 : vector<48x128xf32> to vector<48x128xbf16>
    %56 = vector.extract_strided_slice %55 {offsets = [0, 0], sizes = [24, 128], strides = [1, 1]} : vector<48x128xbf16> to vector<24x128xbf16>
    %57 = vector.extract_strided_slice %55 {offsets = [24, 0], sizes = [24, 128], strides = [1, 1]} : vector<48x128xbf16> to vector<24x128xbf16>
    %58 = tpu.concatenate %56, %57 in 0 : vector<24x128xbf16>, vector<24x128xbf16> -> vector<48x128xbf16>
    %c0_18 = arith.constant 0 : index
    %c0_19 = arith.constant 0 : index
    %59 = vector.load %arg8[%c0_18, %c0_19] : memref<128x128xbf16, #tpu.memory_space<vmem>>, vector<128x128xbf16>
    %cst_20 = arith.constant dense<0.000000e+00> : vector<48x128xf32>
    %60 = tpu.matmul %58, %59, %cst_20 {dimension_numbers = #tpu.dot_dimension_numbers<[1], [0], [0], [1], [0, 0, 1, 1], [], []>} : vector<48x128xbf16>, vector<128x128xbf16>, vector<48x128xf32> -> vector<48x128xf32>
    %c0_21 = arith.constant 0 : index
    %c0_22 = arith.constant 0 : index
    %61 = vector.load %arg9[%c0_21, %c0_22] : memref<1x128xf32, #tpu.memory_space<vmem>>, vector<1x128xf32>
    %62 = vector.broadcast %61 : vector<1x128xf32> to vector<48x128xf32>
    %63 = arith.addf %60, %62 : vector<48x128xf32>
    %cst_23 = arith.constant 0.000000e+00 : f32
    %64 = vector.broadcast %cst_23 : f32 to vector<48x128xf32>
    %65 = arith.maximumf %63, %64 : vector<48x128xf32>
    %66 = arith.truncf %65 : vector<48x128xf32> to vector<48x128xbf16>
    %67 = vector.extract_strided_slice %66 {offsets = [0, 0], sizes = [24, 128], strides = [1, 1]} : vector<48x128xbf16> to vector<24x128xbf16>
    %68 = vector.extract_strided_slice %66 {offsets = [24, 0], sizes = [24, 128], strides = [1, 1]} : vector<48x128xbf16> to vector<24x128xbf16>
    %69 = tpu.concatenate %67, %68 in 0 : vector<24x128xbf16>, vector<24x128xbf16> -> vector<48x128xbf16>
    %c0_24 = arith.constant 0 : index
    %c0_25 = arith.constant 0 : index
    %70 = vector.load %arg10[%c0_24, %c0_25] : memref<128x256xbf16, #tpu.memory_space<vmem>>, vector<128x256xbf16>
    %cst_26 = arith.constant dense<0.000000e+00> : vector<48x256xf32>
    %71 = tpu.matmul %69, %70, %cst_26 {dimension_numbers = #tpu.dot_dimension_numbers<[1], [0], [0], [1], [0, 0, 1, 1], [], []>} : vector<48x128xbf16>, vector<128x256xbf16>, vector<48x256xf32> -> vector<48x256xf32>
    %c0_27 = arith.constant 0 : index
    %c0_28 = arith.constant 0 : index
    %72 = vector.load %arg11[%c0_27, %c0_28] : memref<1x256xf32, #tpu.memory_space<vmem>>, vector<1x256xf32>
    %73 = vector.broadcast %72 : vector<1x256xf32> to vector<48x256xf32>
    %74 = arith.addf %71, %73 : vector<48x256xf32>
    %cst_29 = arith.constant 0.000000e+00 : f32
    %75 = vector.broadcast %cst_29 : f32 to vector<48x256xf32>
    %76 = arith.maximumf %74, %75 : vector<48x256xf32>
    %77 = vector.extract_strided_slice %76 {offsets = [0, 0], sizes = [18, 256], strides = [1, 1]} : vector<48x256xf32> to vector<18x256xf32>
    %cst_30 = arith.constant dense<0.000000e+00> : vector<256xf32>
    %78 = vector.multi_reduction <add>, %77, %cst_30 [0] : vector<18x256xf32> to vector<256xf32>
    %79 = vector.shape_cast %78 : vector<256xf32> to vector<1x256xf32>
    %cst_31 = arith.constant 1.800000e+01 : f32
    %80 = vector.broadcast %cst_31 : f32 to vector<1x256xf32>
    %81 = arith.divf %79, %80 : vector<1x256xf32>
    %82 = vector.broadcast %81 : vector<1x256xf32> to vector<18x256xf32>
    %83 = arith.subf %77, %82 : vector<18x256xf32>
    %84 = arith.mulf %83, %83 : vector<18x256xf32>
    %cst_32 = arith.constant dense<0.000000e+00> : vector<256xf32>
    %85 = vector.multi_reduction <add>, %84, %cst_32 [0] : vector<18x256xf32> to vector<256xf32>
    %86 = vector.shape_cast %85 : vector<256xf32> to vector<1x256xf32>
    %cst_33 = arith.constant 1.700000e+01 : f32
    %87 = vector.broadcast %cst_33 : f32 to vector<1x256xf32>
    %88 = arith.divf %86, %87 : vector<1x256xf32>
    %89 = math.sqrt %88 : vector<1x256xf32>
    %90 = tpu.concatenate %81, %89 in 1 : vector<1x256xf32>, vector<1x256xf32> -> vector<1x512xf32>
    %91 = vector.extract_strided_slice %76 {offsets = [24, 0], sizes = [18, 256], strides = [1, 1]} : vector<48x256xf32> to vector<18x256xf32>
    %cst_34 = arith.constant dense<0.000000e+00> : vector<256xf32>
    %92 = vector.multi_reduction <add>, %91, %cst_34 [0] : vector<18x256xf32> to vector<256xf32>
    %93 = vector.shape_cast %92 : vector<256xf32> to vector<1x256xf32>
    %cst_35 = arith.constant 1.800000e+01 : f32
    %94 = vector.broadcast %cst_35 : f32 to vector<1x256xf32>
    %95 = arith.divf %93, %94 : vector<1x256xf32>
    %96 = vector.broadcast %95 : vector<1x256xf32> to vector<18x256xf32>
    %97 = arith.subf %91, %96 : vector<18x256xf32>
    %98 = arith.mulf %97, %97 : vector<18x256xf32>
    %cst_36 = arith.constant dense<0.000000e+00> : vector<256xf32>
    %99 = vector.multi_reduction <add>, %98, %cst_36 [0] : vector<18x256xf32> to vector<256xf32>
    %100 = vector.shape_cast %99 : vector<256xf32> to vector<1x256xf32>
    %cst_37 = arith.constant 1.700000e+01 : f32
    %101 = vector.broadcast %cst_37 : f32 to vector<1x256xf32>
    %102 = arith.divf %100, %101 : vector<1x256xf32>
    %103 = math.sqrt %102 : vector<1x256xf32>
    %104 = tpu.concatenate %95, %103 in 1 : vector<1x256xf32>, vector<1x256xf32> -> vector<1x512xf32>
    %105 = tpu.concatenate %90, %104 in 0 : vector<1x512xf32>, vector<1x512xf32> -> vector<2x512xf32>
    %106 = arith.truncf %105 : vector<2x512xf32> to vector<2x512xbf16>
    %c0_38 = arith.constant 0 : index
    %c0_39 = arith.constant 0 : index
    %107 = vector.load %arg12[%c0_38, %c0_39] : memref<512x128xbf16, #tpu.memory_space<vmem>>, vector<512x128xbf16>
    %cst_40 = arith.constant dense<0.000000e+00> : vector<2x128xf32>
    %108 = tpu.matmul %106, %107, %cst_40 {dimension_numbers = #tpu.dot_dimension_numbers<[1], [0], [0], [1], [0, 0, 1, 1], [], []>} : vector<2x512xbf16>, vector<512x128xbf16>, vector<2x128xf32> -> vector<2x128xf32>
    %c0_41 = arith.constant 0 : index
    %c0_42 = arith.constant 0 : index
    %109 = vector.load %arg13[%c0_41, %c0_42] : memref<1x128xf32, #tpu.memory_space<vmem>>, vector<1x128xf32>
    %110 = vector.broadcast %109 : vector<1x128xf32> to vector<2x128xf32>
    %111 = arith.addf %108, %110 : vector<2x128xf32>
    %cst_43 = arith.constant 0.000000e+00 : f32
    %112 = vector.broadcast %cst_43 : f32 to vector<2x128xf32>
    %113 = arith.maximumf %111, %112 : vector<2x128xf32>
    %c0_44 = arith.constant 0 : index
    %c0_45 = arith.constant 0 : index
    %114 = vector.load %arg18[%c0_44, %c0_45] : memref<2x128xf32, #tpu.memory_space<vmem>>, vector<2x128xf32>
    tpu.vector_store %arg18[%c0_44, %c0_45], %113 {strides = array<i32>} : memref<2x128xf32, #tpu.memory_space<vmem>>, vector<2x128xf32>,
    %115 = arith.truncf %113 : vector<2x128xf32> to vector<2x128xbf16>
    %c0_46 = arith.constant 0 : index
    %c0_47 = arith.constant 0 : index
    %116 = vector.load %arg14[%c0_46, %c0_47] : memref<128x128xbf16, #tpu.memory_space<vmem>>, vector<128x128xbf16>
    %cst_48 = arith.constant dense<0.000000e+00> : vector<2x128xf32>
    %117 = tpu.matmul %115, %116, %cst_48 {dimension_numbers = #tpu.dot_dimension_numbers<[1], [0], [0], [1], [0, 0, 1, 1], [], []>} : vector<2x128xbf16>, vector<128x128xbf16>, vector<2x128xf32> -> vector<2x128xf32>
    %c0_49 = arith.constant 0 : index
    %c0_50 = arith.constant 0 : index
    %118 = vector.load %arg15[%c0_49, %c0_50] : memref<1x128xf32, #tpu.memory_space<vmem>>, vector<1x128xf32>
    %119 = vector.broadcast %118 : vector<1x128xf32> to vector<2x128xf32>
    %120 = arith.addf %117, %119 : vector<2x128xf32>
    %cst_51 = arith.constant 0.000000e+00 : f32
    %121 = vector.broadcast %cst_51 : f32 to vector<2x128xf32>
    %122 = arith.maximumf %120, %121 : vector<2x128xf32>
    %123 = arith.truncf %122 : vector<2x128xf32> to vector<2x128xbf16>
    %c0_52 = arith.constant 0 : index
    %c0_53 = arith.constant 0 : index
    %124 = vector.load %arg16[%c0_52, %c0_53] : memref<128x16xbf16, #tpu.memory_space<vmem>>, vector<128x16xbf16>
    %cst_54 = arith.constant dense<0.000000e+00> : vector<2x16xf32>
    %125 = tpu.matmul %123, %124, %cst_54 {dimension_numbers = #tpu.dot_dimension_numbers<[1], [0], [0], [1], [0, 0, 1, 1], [], []>} : vector<2x128xbf16>, vector<128x16xbf16>, vector<2x16xf32> -> vector<2x16xf32>
    %c0_55 = arith.constant 0 : index
    %c0_56 = arith.constant 0 : index
    %126 = vector.load %arg17[%c0_55, %c0_56] : memref<1x16xf32, #tpu.memory_space<vmem>>, vector<1x16xf32>
    %127 = vector.broadcast %126 : vector<1x16xf32> to vector<2x16xf32>
    %128 = arith.addf %125, %127 : vector<2x16xf32>
    %c0_57 = arith.constant 0 : index
    %c0_58 = arith.constant 0 : index
    %129 = vector.load %arg19[%c0_57, %c0_58] : memref<2x16xf32, #tpu.memory_space<vmem>>, vector<2x16xf32>
    tpu.vector_store %arg19[%c0_57, %c0_58], %128 {strides = array<i32>} : memref<2x16xf32, #tpu.memory_space<vmem>>, vector<2x16xf32>,
    return
  }
  func.func @transform_0(%arg0: i32) -> (i32, i32) {
    %c0_i32 = arith.constant 0 : i32
    %c0_i32_0 = arith.constant 0 : i32
    %c0_i32_1 = arith.constant 0 : i32
    return %c0_i32, %c0_i32_0 : i32, i32
  }
  func.func @transform_1(%arg0: i32) -> (i32, i32) {
    %c0_i32 = arith.constant 0 : i32
    %c0_i32_0 = arith.constant 0 : i32
    %c0_i32_1 = arith.constant 0 : i32
    return %c0_i32, %c0_i32_0 : i32, i32
  }
  func.func @transform_2(%arg0: i32) -> (i32, i32) {
    %c0_i32 = arith.constant 0 : i32
    %c0_i32_0 = arith.constant 0 : i32
    %c0_i32_1 = arith.constant 0 : i32
    return %c0_i32, %c0_i32_0 : i32, i32
  }
  func.func @transform_3(%arg0: i32) -> (i32, i32) {
    %c0_i32 = arith.constant 0 : i32
    %c0_i32_0 = arith.constant 0 : i32
    %c0_i32_1 = arith.constant 0 : i32
    return %c0_i32, %c0_i32_0 : i32, i32
  }
  func.func @transform_4(%arg0: i32) -> (i32, i32) {
    %c0_i32 = arith.constant 0 : i32
    %c0_i32_0 = arith.constant 0 : i32
    %c0_i32_1 = arith.constant 0 : i32
    return %c0_i32, %c0_i32_0 : i32, i32
  }
  func.func @transform_5(%arg0: i32) -> (i32, i32) {
    %c0_i32 = arith.constant 0 : i32
    %c0_i32_0 = arith.constant 0 : i32
    %c0_i32_1 = arith.constant 0 : i32
    return %c0_i32, %c0_i32_0 : i32, i32
  }
  func.func @transform_6(%arg0: i32) -> (i32, i32) {
    %c0_i32 = arith.constant 0 : i32
    %c0_i32_0 = arith.constant 0 : i32
    %c0_i32_1 = arith.constant 0 : i32
    return %c0_i32, %c0_i32_0 : i32, i32
  }
  func.func @transform_7(%arg0: i32) -> (i32, i32) {
    %c0_i32 = arith.constant 0 : i32
    %c0_i32_0 = arith.constant 0 : i32
    %c0_i32_1 = arith.constant 0 : i32
    return %c0_i32, %c0_i32_0 : i32, i32
  }
  func.func @transform_8(%arg0: i32) -> (i32, i32) {
    %c0_i32 = arith.constant 0 : i32
    %c0_i32_0 = arith.constant 0 : i32
    %c0_i32_1 = arith.constant 0 : i32
    return %c0_i32, %c0_i32_0 : i32, i32
  }
  func.func @transform_9(%arg0: i32) -> (i32, i32) {
    %c0_i32 = arith.constant 0 : i32
    %c0_i32_0 = arith.constant 0 : i32
    %c0_i32_1 = arith.constant 0 : i32
    return %c0_i32, %c0_i32_0 : i32, i32
  }
  func.func @transform_10(%arg0: i32) -> (i32, i32) {
    %c0_i32 = arith.constant 0 : i32
    %c0_i32_0 = arith.constant 0 : i32
    %c0_i32_1 = arith.constant 0 : i32
    return %c0_i32, %c0_i32_0 : i32, i32
  }
  func.func @transform_11(%arg0: i32) -> (i32, i32) {
    %c0_i32 = arith.constant 0 : i32
    %c0_i32_0 = arith.constant 0 : i32
    %c0_i32_1 = arith.constant 0 : i32
    return %c0_i32, %c0_i32_0 : i32, i32
  }
  func.func @transform_12(%arg0: i32) -> (i32, i32) {
    %c0_i32 = arith.constant 0 : i32
    %c0_i32_0 = arith.constant 0 : i32
    %c0_i32_1 = arith.constant 0 : i32
    return %c0_i32, %c0_i32_0 : i32, i32
  }
  func.func @transform_13(%arg0: i32) -> (i32, i32) {
    %c0_i32 = arith.constant 0 : i32
    %c0_i32_0 = arith.constant 0 : i32
    %c0_i32_1 = arith.constant 0 : i32
    return %c0_i32, %c0_i32_0 : i32, i32
  }
  func.func @transform_14(%arg0: i32) -> (i32, i32) {
    %c0_i32 = arith.constant 0 : i32
    %c0_i32_0 = arith.constant 0 : i32
    %c0_i32_1 = arith.constant 0 : i32
    return %c0_i32, %c0_i32_0 : i32, i32
  }
  func.func @transform_15(%arg0: i32) -> (i32, i32) {
    %c0_i32 = arith.constant 0 : i32
    %c0_i32_0 = arith.constant 0 : i32
    %c0_i32_1 = arith.constant 0 : i32
    return %c0_i32, %c0_i32_0 : i32, i32
  }
  func.func @transform_16(%arg0: i32) -> (i32, i32) {
    %c0_i32 = arith.constant 0 : i32
    %c0_i32_0 = arith.constant 0 : i32
    %c0_i32_1 = arith.constant 0 : i32
    return %c0_i32, %c0_i32_0 : i32, i32
  }
  func.func @transform_17(%arg0: i32) -> (i32, i32) {
    %c0_i32 = arith.constant 0 : i32
    %c0_i32_0 = arith.constant 0 : i32
    %c0_i32_1 = arith.constant 0 : i32
    return %c0_i32, %c0_i32_0 : i32, i32
  }
  func.func @transform_18(%arg0: i32) -> (i32, i32) {
    %c0_i32 = arith.constant 0 : i32
    %c0_i32_0 = arith.constant 0 : i32
    %c0_i32_1 = arith.constant 0 : i32
    return %c0_i32, %c0_i32_0 : i32, i32
  }
}

</mosaic_0001>

<llo_original>
// kernel: tdnn_v1_forward.1
$region0: #{tdnn_v1_forward.1}
  #allocation0 [shape = 'u32[]', space=smem, size = 0x4, offset = 0x4, fixed_abs, tag = 'smem constant byte address 0x4 - core index']
  #allocation1 [shape = 'u32[144,128]{1,0:T(1,128)}', space=vmem, size = 0x12000, scoped, tag = 'internal scratch']
  %s0 = inlined_call_operand.vmem [shape: bf16[96,128], index: 0, kind: input, shape index: {}]
  %s1 = inlined_call_operand.vmem [shape: bf16[640,128], index: 1, kind: input, shape index: {}]
  %s2 = inlined_call_operand.vmem [shape: f32[1,128], index: 2, kind: input, shape index: {}]
  %s3 = inlined_call_operand.hbm [shape: bf16[384,128], index: 3, kind: input, shape index: {}]
  %s4 = inlined_call_operand.vmem [shape: f32[1,128], index: 4, kind: input, shape index: {}]
  %s5 = inlined_call_operand.vmem [shape: bf16[384,128], index: 5, kind: input, shape index: {}]
  %s6 = inlined_call_operand.vmem [shape: f32[1,128], index: 6, kind: input, shape index: {}]
  %s7 = inlined_call_operand.hbm [shape: bf16[128,128], index: 7, kind: input, shape index: {}]
  %s8 = inlined_call_operand.vmem [shape: f32[1,128], index: 8, kind: input, shape index: {}]
  %s9 = inlined_call_operand.vmem [shape: bf16[128,256], index: 9, kind: input, shape index: {}]
  %s10 = inlined_call_operand.vmem [shape: f32[1,256], index: 10, kind: input, shape index: {}]
  %s11 = inlined_call_operand.hbm [shape: bf16[512,128], index: 11, kind: input, shape index: {}]
  %s12 = inlined_call_operand.vmem [shape: f32[1,128], index: 12, kind: input, shape index: {}]
  %s13 = inlined_call_operand.hbm [shape: bf16[128,128], index: 13, kind: input, shape index: {}]
  %s14 = inlined_call_operand.vmem [shape: f32[1,128], index: 14, kind: input, shape index: {}]
  %s15 = inlined_call_operand.hbm [shape: bf16[128,16], index: 15, kind: input, shape index: {}]
  %s16 = inlined_call_operand.vmem [shape: f32[1,16], index: 16, kind: input, shape index: {}]
  %s17 = inlined_call_operand.hbm [shape: f32[2,128], index: 17, kind: output, shape index: {0}]
  %s18 = inlined_call_operand.hbm [shape: f32[2,16], index: 18, kind: output, shape index: {1}]
  %19 = xla_tuple %s17, %s18
  %s20 = sld [smem:[#allocation0]]
  $region106: #{tdnn_v1_forward.1} parent=0
    _
  %s22 = ssub.s32 1, %s20
  %s23 = scalar_select 0, %s22, %s20
  $region1: #{tdnn_v1_forward.1} parent=0
    #allocation2 [shape = 'u8[98304]{0}', space=vmem, size = 0x18000, scoped, tag = 'input window, operand 3, single buffered']
    #allocation3 [shape = 's32[1]{0}', space=sflag, size = 0x4, scoped, tag = 'scoped memory for tdnn_v1_forward.1']
    #allocation4 [shape = 's32[1]{0}', space=sflag, size = 0x4, scoped, tag = 'scoped memory for tdnn_v1_forward.1']
    #allocation5 [shape = 'u8[32768]{0}', space=vmem, size = 0x8000, scoped, tag = 'input window, operand 7, single buffered']
    #allocation6 [shape = 's32[1]{0}', space=sflag, size = 0x4, scoped, tag = 'scoped memory for tdnn_v1_forward.1']
    #allocation7 [shape = 'u8[131072]{0}', space=vmem, size = 0x20000, scoped, tag = 'input window, operand 11, single buffered']
    #allocation8 [shape = 'u8[32768]{0}', space=vmem, size = 0x8000, scoped, tag = 'input window, operand 13, single buffered']
    #allocation9 [shape = 's32[1]{0}', space=sflag, size = 0x4, scoped, tag = 'scoped memory for tdnn_v1_forward.1']
    #allocation10 [shape = 'u8[32768]{0}', space=vmem, size = 0x8000, scoped, tag = 'input window, operand 15, single buffered']
    #allocation11 [shape = 'u8[1024]{0}', space=vmem, size = 0x400, scoped, tag = 'output window, operand 0, single buffered']
    #allocation12 [shape = 'u8[1024]{0}', space=vmem, size = 0x400, scoped, tag = 'output window, operand 1, single buffered']
    #allocation13 [shape = 's32[1]{0}', space=sflag, size = 0x4, scoped, tag = 'scoped memory for tdnn_v1_forward.1']
    %24 = vsyncpa [#allocation3], 0
    %25 = vsyncpa [#allocation6], 0
    %26 = vsyncpa [#allocation9], 0
    %27 = vsyncpa [#allocation4], 0
    %28 = vsyncpa [#allocation13], 0
    // Predicated region
    $region2: #{tdnn_v1_forward.1} parent=1 // pred_check
      _
    $region3: #{tdnn_v1_forward.1} parent=1 // pred_check_branch
      %30 = sbr.rel (0) target = $region5
    $region4: #{tdnn_v1_forward.1} parent=1 // pred_region
      _
    $region5: #{tdnn_v1_forward.1} parent=1 // pred_fallthru
      _
    // Predicated region
    $region6: #{tdnn_v1_forward.1} parent=1 // pred_check
      _
    $region7: #{tdnn_v1_forward.1} parent=1 // pred_check_branch
      %32 = sbr.rel (0) target = $region9
    $region8: #{tdnn_v1_forward.1} parent=1 // pred_region
      _
    $region9: #{tdnn_v1_forward.1} parent=1 // pred_fallthru
      _
    // Predicated region
    $region10: #{tdnn_v1_forward.1} parent=1 // pred_check
      _
    $region11: #{tdnn_v1_forward.1} parent=1 // pred_check_branch
      %34 = sbr.rel (0) target = $region13
    $region12: #{tdnn_v1_forward.1} parent=1 // pred_region
      _
    $region13: #{tdnn_v1_forward.1} parent=1 // pred_fallthru
      _
    // Predicated region
    $region14: #{tdnn_v1_forward.1} parent=1 // pred_check
      _
    $region15: #{tdnn_v1_forward.1} parent=1 // pred_check_branch
      %36 = sbr.rel (0) target = $region17
    $region16: #{tdnn_v1_forward.1} parent=1 // pred_region
      %s38 = ssub.s32 3072, 3072
      %39 = vsyncadd [#allocation3], %s38
      %s40 = sshll.u32 [#allocation2], 4
      %s41 = int_to_ptr.vmem [resolvable:$true] %s40
      %46 = dma.hbm_to_vmem [thread:$0]  %s3, 3072, %s41, [#allocation3], 64, 64, 4
    $region17: #{tdnn_v1_forward.1} parent=1 // pred_fallthru
      _
    // Predicated region
    $region18: #{tdnn_v1_forward.1} parent=1 // pred_check
      _
    $region19: #{tdnn_v1_forward.1} parent=1 // pred_check_branch
      %48 = sbr.rel (0) target = $region21
    $region20: #{tdnn_v1_forward.1} parent=1 // pred_region
      _
    $region21: #{tdnn_v1_forward.1} parent=1 // pred_fallthru
      _
    // Predicated region
    $region22: #{tdnn_v1_forward.1} parent=1 // pred_check
      _
    $region23: #{tdnn_v1_forward.1} parent=1 // pred_check_branch
      %50 = sbr.rel (0) target = $region25
    $region24: #{tdnn_v1_forward.1} parent=1 // pred_region
      _
    $region25: #{tdnn_v1_forward.1} parent=1 // pred_fallthru
      _
    // Predicated region
    $region26: #{tdnn_v1_forward.1} parent=1 // pred_check
      _
    $region27: #{tdnn_v1_forward.1} parent=1 // pred_check_branch
      %52 = sbr.rel (0) target = $region29
    $region28: #{tdnn_v1_forward.1} parent=1 // pred_region
      _
    $region29: #{tdnn_v1_forward.1} parent=1 // pred_fallthru
      _
    // Predicated region
    $region30: #{tdnn_v1_forward.1} parent=1 // pred_check
      _
    $region31: #{tdnn_v1_forward.1} parent=1 // pred_check_branch
      %54 = sbr.rel (0) target = $region33
    $region32: #{tdnn_v1_forward.1} parent=1 // pred_region
      %s56 = ssub.s32 1024, 1024
      %57 = vsyncadd [#allocation6], %s56
      %s58 = sshll.u32 [#allocation5], 4
      %s59 = int_to_ptr.vmem [resolvable:$true] %s58
      %64 = dma.hbm_to_vmem [thread:$0]  %s7, 1024, %s59, [#allocation6], 64, 64, 4
    $region33: #{tdnn_v1_forward.1} parent=1 // pred_fallthru
      _
    // Predicated region
    $region34: #{tdnn_v1_forward.1} parent=1 // pred_check
      _
    $region35: #{tdnn_v1_forward.1} parent=1 // pred_check_branch
      %66 = sbr.rel (0) target = $region37
    $region36: #{tdnn_v1_forward.1} parent=1 // pred_region
      _
    $region37: #{tdnn_v1_forward.1} parent=1 // pred_fallthru
      _
    // Predicated region
    $region38: #{tdnn_v1_forward.1} parent=1 // pred_check
      _
    $region39: #{tdnn_v1_forward.1} parent=1 // pred_check_branch
      %68 = sbr.rel (0) target = $region41
    $region40: #{tdnn_v1_forward.1} parent=1 // pred_region
      _
    $region41: #{tdnn_v1_forward.1} parent=1 // pred_fallthru
      _
    // Predicated region
    $region42: #{tdnn_v1_forward.1} parent=1 // pred_check
      _
    $region43: #{tdnn_v1_forward.1} parent=1 // pred_check_branch
      %70 = sbr.rel (0) target = $region45
    $region44: #{tdnn_v1_forward.1} parent=1 // pred_region
      _
    $region45: #{tdnn_v1_forward.1} parent=1 // pred_fallthru
      _
    // Predicated region
    $region46: #{tdnn_v1_forward.1} parent=1 // pred_check
      _
    $region47: #{tdnn_v1_forward.1} parent=1 // pred_check_branch
      %72 = sbr.rel (0) target = $region49
    $region48: #{tdnn_v1_forward.1} parent=1 // pred_region
      %s74 = ssub.s32 4096, 4096
      %75 = vsyncadd [#allocation6], %s74
      %s76 = sshll.u32 [#allocation7], 4
      %s77 = int_to_ptr.vmem [resolvable:$true] %s76
      %82 = dma.hbm_to_vmem [thread:$0]  %s11, 4096, %s77, [#allocation6], 64, 64, 4
    $region49: #{tdnn_v1_forward.1} parent=1 // pred_fallthru
      _
    // Predicated region
    $region50: #{tdnn_v1_forward.1} parent=1 // pred_check
      _
    $region51: #{tdnn_v1_forward.1} parent=1 // pred_check_branch
      %84 = sbr.rel (0) target = $region53
    $region52: #{tdnn_v1_forward.1} parent=1 // pred_region
      _
    $region53: #{tdnn_v1_forward.1} parent=1 // pred_fallthru
      _
    // Predicated region
    $region54: #{tdnn_v1_forward.1} parent=1 // pred_check
      _
    $region55: #{tdnn_v1_forward.1} parent=1 // pred_check_branch
      %86 = sbr.rel (0) target = $region57
    $region56: #{tdnn_v1_forward.1} parent=1 // pred_region
      %s88 = ssub.s32 1024, 1024
      %89 = vsyncadd [#allocation9], %s88
      %s90 = sshll.u32 [#allocation8], 4
      %s91 = int_to_ptr.vmem [resolvable:$true] %s90
      %96 = dma.hbm_to_vmem [thread:$0]  %s13, 1024, %s91, [#allocation9], 64, 64, 4
    $region57: #{tdnn_v1_forward.1} parent=1 // pred_fallthru
      _
    // Predicated region
    $region58: #{tdnn_v1_forward.1} parent=1 // pred_check
      _
    $region59: #{tdnn_v1_forward.1} parent=1 // pred_check_branch
      %98 = sbr.rel (0) target = $region61
    $region60: #{tdnn_v1_forward.1} parent=1 // pred_region
      _
    $region61: #{tdnn_v1_forward.1} parent=1 // pred_fallthru
      _
    // Predicated region
    $region62: #{tdnn_v1_forward.1} parent=1 // pred_check
      _
    $region63: #{tdnn_v1_forward.1} parent=1 // pred_check_branch
      %100 = sbr.rel (0) target = $region65
    $region64: #{tdnn_v1_forward.1} parent=1 // pred_region
      %s102 = ssub.s32 1024, 1024
      %103 = vsyncadd [#allocation9], %s102
      %s104 = sshll.u32 [#allocation10], 4
      %s105 = int_to_ptr.vmem [resolvable:$true] %s104
      %110 = dma.hbm_to_vmem [thread:$0]  %s15, 1024, %s105, [#allocation9], 64, 64, 4
    $region65: #{tdnn_v1_forward.1} parent=1 // pred_fallthru
      _
    // Predicated region
    $region66: #{tdnn_v1_forward.1} parent=1 // pred_check
      _
    $region67: #{tdnn_v1_forward.1} parent=1 // pred_check_branch
      %112 = sbr.rel (0) target = $region69
    $region68: #{tdnn_v1_forward.1} parent=1 // pred_region
      _
    $region69: #{tdnn_v1_forward.1} parent=1 // pred_fallthru
      _
    // Predicated region
    $region70: #{tdnn_v1_forward.1} parent=1 // pred_check
      _
    $region71: #{tdnn_v1_forward.1} parent=1 // pred_check_branch
      %114 = sbr.rel (0) target = $region73
    $region72: #{tdnn_v1_forward.1} parent=1 // pred_region
      %115 = dma.done [#allocation3], 3072
    $region73: #{tdnn_v1_forward.1} parent=1 // pred_fallthru
      _
    // Predicated region
    $region74: #{tdnn_v1_forward.1} parent=1 // pred_check
      _
    $region75: #{tdnn_v1_forward.1} parent=1 // pred_check_branch
      %117 = sbr.rel (0) target = $region77
    $region76: #{tdnn_v1_forward.1} parent=1 // pred_region
      %118 = dma.done [#allocation6], 1024
    $region77: #{tdnn_v1_forward.1} parent=1 // pred_fallthru
      _
    // Predicated region
    $region78: #{tdnn_v1_forward.1} parent=1 // pred_check
      _
    $region79: #{tdnn_v1_forward.1} parent=1 // pred_check_branch
      %120 = sbr.rel (0) target = $region81
    $region80: #{tdnn_v1_forward.1} parent=1 // pred_region
      %121 = dma.done [#allocation6], 4096
    $region81: #{tdnn_v1_forward.1} parent=1 // pred_fallthru
      _
    // Predicated region
    $region82: #{tdnn_v1_forward.1} parent=1 // pred_check
      _
    $region83: #{tdnn_v1_forward.1} parent=1 // pred_check_branch
      %123 = sbr.rel (0) target = $region85
    $region84: #{tdnn_v1_forward.1} parent=1 // pred_region
      %124 = dma.done [#allocation9], 1024
    $region85: #{tdnn_v1_forward.1} parent=1 // pred_fallthru
      _
    // Predicated region
    $region86: #{tdnn_v1_forward.1} parent=1 // pred_check
      _
    $region87: #{tdnn_v1_forward.1} parent=1 // pred_check_branch
      %126 = sbr.rel (0) target = $region89
    $region88: #{tdnn_v1_forward.1} parent=1 // pred_region
      %127 = dma.done [#allocation9], 1024
    $region89: #{tdnn_v1_forward.1} parent=1 // pred_fallthru
      _
    %v129 = vld [vmem:[%s0] sm:$0xf]
    %v130 = vld [vmem:[%s0 + $0x4] sm:$0xf]
    %v131 = vld [vmem:[%s0 + $0x8] sm:$0xf]
    %v132 = vld [vmem:[%s0 + $0xc] sm:$0xf]
    %v133 = vld [vmem:[%s0 + $0x10] sm:$0xf]
    %v134 = vld [vmem:[%s0 + $0x14] sm:$0xf]
    %v135 = vld [vmem:[%s0 + $0x18] sm:$0xf]
    %v136 = vld [vmem:[%s0 + $0x1c] sm:$0xf]
    %v137 = vld [vmem:[%s0 + $0x20] sm:$0xf]
    %v138 = vld [vmem:[%s0 + $0x24] sm:$0xf]
    %v139 = vld [vmem:[%s0 + $0x28] sm:$0xf]
    %v140 = vld [vmem:[%s0 + $0x2c] sm:$0xf]
    %v146 = vunpack.c.l.b16 %v129
    %v147 = vunpack.c.l.b16 %v130
    %v148 = vunpack.c.l.b16 %v131
    %v149 = vunpack.c.l.b16 %v132
    %v150 = vunpack.c.l.b16 %v133
    %v151 = vpack.c.b16 %v147, %v146
    %v152 = vpack.c.b16 %v149, %v148
    %v153 = vpack.c.b16 %v150, %v150
    %v157 = vunpack.c.l.b16 %v134
    %v158 = vpack.c.b16 %v157, %v150
    %vm159 = vsmask.f32 7424
    %v161 = vshrl.u32 %v151, 16
    %v163 = vshll.u32 %v151, 16
    %v165 = vrot.slane %v163, 1
    %v166 = vor.u32 %v161, %v165
    %v168 = vshll.u32 %v152, 16
    %v170 = vrot.slane %v168, 1
    %v171 = vsel %vm159, %v166, %v170
    %v172 = vshrl.u32 %v152, 16
    %v174 = vor.u32 %v172, %v170
    %v176 = vshll.u32 %v158, 16
    %v178 = vrot.slane %v176, 1
    %v179 = vsel %vm159, %v174, %v178
    %v180 = vshrl.u32 %v158, 16
    %v182 = vor.u32 %v180, %v178
    %vm185 = vcmask 1046528
    %v186 = vrot.slane %v151, 1
    %v187 = vrot.slane %v152, 1
    %v188 = vsel %vm185, %v186, %v187
    %v189 = vrot.slane %v158, 1
    %v190 = vsel %vm185, %v187, %v189
    %vm193 = vsmask.f32 6400
    %v194 = vrot.slane %v161, 1
    %v195 = vrot.slane %v163, 2
    %v196 = vor.u32 %v194, %v195
    %v197 = vrot.slane %v172, 1
    %v198 = vrot.slane %v168, 2
    %v199 = vor.u32 %v197, %v198
    %v200 = vsel %vm193, %v196, %v199
    %v201 = vrot.slane %v180, 1
    %v202 = vrot.slane %v176, 2
    %v203 = vor.u32 %v201, %v202
    %v204 = vsel %vm193, %v199, %v203
    %vm207 = vcmask 1045504
    %v208 = vrot.slane %v151, 2
    %v209 = vrot.slane %v152, 2
    %v210 = vsel %vm207, %v208, %v209
    %v211 = vrot.slane %v158, 2
    %v212 = vsel %vm207, %v209, %v211
    %v220 = vunpack.c.l.b16 %v135
    %v221 = vunpack.c.l.b16 %v136
    %v222 = vunpack.c.l.b16 %v137
    %v223 = vunpack.c.l.b16 %v138
    %v224 = vunpack.c.l.b16 %v139
    %v225 = vpack.c.b16 %v221, %v220
    %v226 = vpack.c.b16 %v223, %v222
    %v227 = vpack.c.b16 %v224, %v224
    %v229 = vunpack.c.l.b16 %v140
    %v230 = vpack.c.b16 %v229, %v224
    %v232 = vshrl.u32 %v225, 16
    %v234 = vshll.u32 %v225, 16
    %v236 = vrot.slane %v234, 1
    %v237 = vor.u32 %v232, %v236
    %v239 = vshll.u32 %v226, 16
    %v241 = vrot.slane %v239, 1
    %v242 = vsel %vm159, %v237, %v241
    %v243 = vshrl.u32 %v226, 16
    %v245 = vor.u32 %v243, %v241
    %v247 = vshll.u32 %v230, 16
    %v249 = vrot.slane %v247, 1
    %v250 = vsel %vm159, %v245, %v249
    %v251 = vshrl.u32 %v230, 16
    %v253 = vor.u32 %v251, %v249
    %v254 = vrot.slane %v225, 1
    %v255 = vrot.slane %v226, 1
    %v256 = vsel %vm185, %v254, %v255
    %v257 = vrot.slane %v230, 1
    %v258 = vsel %vm185, %v255, %v257
    %v259 = vrot.slane %v232, 1
    %v260 = vrot.slane %v234, 2
    %v261 = vor.u32 %v259, %v260
    %v262 = vrot.slane %v243, 1
    %v263 = vrot.slane %v239, 2
    %v264 = vor.u32 %v262, %v263
    %v265 = vsel %vm193, %v261, %v264
    %v266 = vrot.slane %v251, 1
    %v267 = vrot.slane %v247, 2
    %v268 = vor.u32 %v266, %v267
    %v269 = vsel %vm193, %v264, %v268
    %v270 = vrot.slane %v225, 2
    %v271 = vrot.slane %v226, 2
    %v272 = vsel %vm207, %v270, %v271
    %v273 = vrot.slane %v230, 2
    %v274 = vsel %vm207, %v271, %v273
    %vm275 = vcmask 1043456
    %v276 = vrot.slane %v225, 4
    %v277 = vrot.slane %v242, 4
    %v278 = vrot.slane %v256, 4
    %v279 = vrot.slane %v265, 4
    %v280 = vrot.slane %v272, 4
    %v281 = vrot.slane %v226, 4
    %v282 = vsel %vm275, %v276, %v281
    %v283 = vrot.slane %v250, 4
    %v284 = vsel %vm275, %v277, %v283
    %v285 = vrot.slane %v258, 4
    %v286 = vsel %vm275, %v278, %v285
    %v287 = vrot.slane %v269, 4
    %v288 = vsel %vm275, %v279, %v287
    %v289 = vrot.slane %v274, 4
    %v290 = vsel %vm275, %v280, %v289
    %v291 = vrot.slane %v227, 4
    %v292 = vsel %vm275, %v281, %v291
    %v293 = vrot.slane %v253, 4
    %v294 = vsel %vm275, %v283, %v293
    %v295 = vrot.slane %v257, 4
    %v296 = vsel %vm275, %v285, %v295
    %v297 = vrot.slane %v268, 4
    %v298 = vsel %vm275, %v287, %v297
    %v299 = vrot.slane %v273, 4
    %v300 = vsel %vm275, %v289, %v299
    %vm311 = vcmask 1043456
    %v314 = vsel %vm311, %v153, %v276
    %v318 = vsel %vm311, %v182, %v277
    %v322 = vsel %vm311, %v189, %v278
    %v326 = vsel %vm311, %v203, %v279
    %v330 = vsel %vm311, %v211, %v280
    %v332 = vld [vmem:[%s1] sm:$0xf]
    %v333 = vld [vmem:[%s1 + $0x4] sm:$0xf]
    %v334 = vld [vmem:[%s1 + $0x8] sm:$0xf]
    %v335 = vld [vmem:[%s1 + $0xc] sm:$0xf]
    %v336 = vld [vmem:[%s1 + $0x10] sm:$0xf]
    %v337 = vld [vmem:[%s1 + $0x14] sm:$0xf]
    %v338 = vld [vmem:[%s1 + $0x18] sm:$0xf]
    %v339 = vld [vmem:[%s1 + $0x1c] sm:$0xf]
    %v340 = vld [vmem:[%s1 + $0x20] sm:$0xf]
    %v341 = vld [vmem:[%s1 + $0x24] sm:$0xf]
    %v342 = vld [vmem:[%s1 + $0x28] sm:$0xf]
    %v343 = vld [vmem:[%s1 + $0x2c] sm:$0xf]
    %v344 = vld [vmem:[%s1 + $0x30] sm:$0xf]
    %v345 = vld [vmem:[%s1 + $0x34] sm:$0xf]
    %v346 = vld [vmem:[%s1 + $0x38] sm:$0xf]
    %v347 = vld [vmem:[%s1 + $0x3c] sm:$0xf]
    %v348 = vld [vmem:[%s1 + $0x40] sm:$0xf]
    %v349 = vld [vmem:[%s1 + $0x44] sm:$0xf]
    %v350 = vld [vmem:[%s1 + $0x48] sm:$0xf]
    %v351 = vld [vmem:[%s1 + $0x4c] sm:$0xf]
    %v352 = vld [vmem:[%s1 + $0x50] sm:$0xf]
    %v353 = vld [vmem:[%s1 + $0x54] sm:$0xf]
    %v354 = vld [vmem:[%s1 + $0x58] sm:$0xf]
    %v355 = vld [vmem:[%s1 + $0x5c] sm:$0xf]
    %v356 = vld [vmem:[%s1 + $0x60] sm:$0xf]
    %v357 = vld [vmem:[%s1 + $0x64] sm:$0xf]
    %v358 = vld [vmem:[%s1 + $0x68] sm:$0xf]
    %v359 = vld [vmem:[%s1 + $0x6c] sm:$0xf]
    %v360 = vld [vmem:[%s1 + $0x70] sm:$0xf]
    %v361 = vld [vmem:[%s1 + $0x74] sm:$0xf]
    %v362 = vld [vmem:[%s1 + $0x78] sm:$0xf]
    %v363 = vld [vmem:[%s1 + $0x7c] sm:$0xf]
    %v364 = vld [vmem:[%s1 + $0x80] sm:$0xf]
    %v365 = vld [vmem:[%s1 + $0x84] sm:$0xf]
    %v366 = vld [vmem:[%s1 + $0x88] sm:$0xf]
    %v367 = vld [vmem:[%s1 + $0x8c] sm:$0xf]
    %v368 = vld [vmem:[%s1 + $0x90] sm:$0xf]
    %v369 = vld [vmem:[%s1 + $0x94] sm:$0xf]
    %v370 = vld [vmem:[%s1 + $0x98] sm:$0xf]
    %v371 = vld [vmem:[%s1 + $0x9c] sm:$0xf]
    %v372 = vld [vmem:[%s1 + $0xa0] sm:$0xf]
    %v373 = vld [vmem:[%s1 + $0xa4] sm:$0xf]
    %v374 = vld [vmem:[%s1 + $0xa8] sm:$0xf]
    %v375 = vld [vmem:[%s1 + $0xac] sm:$0xf]
    %v376 = vld [vmem:[%s1 + $0xb0] sm:$0xf]
    %v377 = vld [vmem:[%s1 + $0xb4] sm:$0xf]
    %v378 = vld [vmem:[%s1 + $0xb8] sm:$0xf]
    %v379 = vld [vmem:[%s1 + $0xbc] sm:$0xf]
    %v380 = vld [vmem:[%s1 + $0xc0] sm:$0xf]
    %v381 = vld [vmem:[%s1 + $0xc4] sm:$0xf]
    %v382 = vld [vmem:[%s1 + $0xc8] sm:$0xf]
    %v383 = vld [vmem:[%s1 + $0xcc] sm:$0xf]
    %v384 = vld [vmem:[%s1 + $0xd0] sm:$0xf]
    %v385 = vld [vmem:[%s1 + $0xd4] sm:$0xf]
    %v386 = vld [vmem:[%s1 + $0xd8] sm:$0xf]
    %v387 = vld [vmem:[%s1 + $0xdc] sm:$0xf]
    %v388 = vld [vmem:[%s1 + $0xe0] sm:$0xf]
    %v389 = vld [vmem:[%s1 + $0xe4] sm:$0xf]
    %v390 = vld [vmem:[%s1 + $0xe8] sm:$0xf]
    %v391 = vld [vmem:[%s1 + $0xec] sm:$0xf]
    %v392 = vld [vmem:[%s1 + $0xf0] sm:$0xf]
    %v393 = vld [vmem:[%s1 + $0xf4] sm:$0xf]
    %v394 = vld [vmem:[%s1 + $0xf8] sm:$0xf]
    %v395 = vld [vmem:[%s1 + $0xfc] sm:$0xf]
    %v396 = vld [vmem:[%s1 + $0x100] sm:$0xf]
    %v397 = vld [vmem:[%s1 + $0x104] sm:$0xf]
    %v398 = vld [vmem:[%s1 + $0x108] sm:$0xf]
    %v399 = vld [vmem:[%s1 + $0x10c] sm:$0xf]
    %v400 = vld [vmem:[%s1 + $0x110] sm:$0xf]
    %v401 = vld [vmem:[%s1 + $0x114] sm:$0xf]
    %v402 = vld [vmem:[%s1 + $0x118] sm:$0xf]
    %v403 = vld [vmem:[%s1 + $0x11c] sm:$0xf]
    %v404 = vld [vmem:[%s1 + $0x120] sm:$0xf]
    %v405 = vld [vmem:[%s1 + $0x124] sm:$0xf]
    %v406 = vld [vmem:[%s1 + $0x128] sm:$0xf]
    %v407 = vld [vmem:[%s1 + $0x12c] sm:$0xf]
    %v408 = vld [vmem:[%s1 + $0x130] sm:$0xf]
    %v409 = vld [vmem:[%s1 + $0x134] sm:$0xf]
    %v410 = vld [vmem:[%s1 + $0x138] sm:$0xf]
    %v411 = vld [vmem:[%s1 + $0x13c] sm:$0xf]
    %v412 = vld [vmem:[%s2] sm:$0x1]
    %v414 = vlaneseq
    %v415 = vshrl.u32 %v414, 7
    %v416 = vsub.s32 0, %v415
    %v417 = vrot.slane %v412, %v416
    %v499 = vunpack.c.l.b16 %v332
    %v500 = vunpack.c.l.b16 %v333
    %v501 = vunpack.c.l.b16 %v334
    %v502 = vunpack.c.l.b16 %v335
    %v503 = vunpack.c.l.b16 %v336
    %v504 = vunpack.c.l.b16 %v337
    %v505 = vunpack.c.l.b16 %v338
    %v506 = vunpack.c.l.b16 %v339
    %v507 = vunpack.c.l.b16 %v340
    %v508 = vunpack.c.l.b16 %v341
    %v509 = vunpack.c.l.b16 %v342
    %v510 = vunpack.c.l.b16 %v343
    %v511 = vunpack.c.l.b16 %v344
    %v512 = vunpack.c.l.b16 %v345
    %v513 = vunpack.c.l.b16 %v346
    %v514 = vunpack.c.l.b16 %v347
    %v515 = vunpack.c.l.b16 %v348
    %v516 = vunpack.c.l.b16 %v349
    %v517 = vunpack.c.l.b16 %v350
    %v518 = vunpack.c.l.b16 %v351
    %v519 = vunpack.c.l.b16 %v352
    %v520 = vunpack.c.l.b16 %v353
    %v521 = vunpack.c.l.b16 %v354
    %v522 = vunpack.c.l.b16 %v355
    %v523 = vunpack.c.l.b16 %v356
    %v524 = vunpack.c.l.b16 %v357
    %v525 = vunpack.c.l.b16 %v358
    %v526 = vunpack.c.l.b16 %v359
    %v527 = vunpack.c.l.b16 %v360
    %v528 = vunpack.c.l.b16 %v361
    %v529 = vunpack.c.l.b16 %v362
    %v530 = vunpack.c.l.b16 %v363
    %v531 = vunpack.c.l.b16 %v364
    %v532 = vunpack.c.l.b16 %v365
    %v533 = vunpack.c.l.b16 %v366
    %v534 = vunpack.c.l.b16 %v367
    %v535 = vunpack.c.l.b16 %v368
    %v536 = vunpack.c.l.b16 %v369
    %v537 = vunpack.c.l.b16 %v370
    %v538 = vunpack.c.l.b16 %v371
    %v539 = vunpack.c.l.b16 %v372
    %v540 = vunpack.c.l.b16 %v373
    %v541 = vunpack.c.l.b16 %v374
    %v542 = vunpack.c.l.b16 %v375
    %v543 = vunpack.c.l.b16 %v376
    %v544 = vunpack.c.l.b16 %v377
    %v545 = vunpack.c.l.b16 %v378
    %v546 = vunpack.c.l.b16 %v379
    %v547 = vunpack.c.l.b16 %v380
    %v548 = vunpack.c.l.b16 %v381
    %v549 = vunpack.c.l.b16 %v382
    %v550 = vunpack.c.l.b16 %v383
    %v551 = vunpack.c.l.b16 %v384
    %v552 = vunpack.c.l.b16 %v385
    %v553 = vunpack.c.l.b16 %v386
    %v554 = vunpack.c.l.b16 %v387
    %v555 = vunpack.c.l.b16 %v388
    %v556 = vunpack.c.l.b16 %v389
    %v557 = vunpack.c.l.b16 %v390
    %v558 = vunpack.c.l.b16 %v391
    %v559 = vunpack.c.l.b16 %v392
    %v560 = vunpack.c.l.b16 %v393
    %v561 = vunpack.c.l.b16 %v394
    %v562 = vunpack.c.l.b16 %v395
    %v563 = vunpack.c.l.b16 %v396
    %v564 = vunpack.c.l.b16 %v397
    %v565 = vunpack.c.l.b16 %v398
    %v566 = vunpack.c.l.b16 %v399
    %v567 = vunpack.c.l.b16 %v400
    %v568 = vunpack.c.l.b16 %v401
    %v569 = vunpack.c.l.b16 %v402
    %v570 = vunpack.c.l.b16 %v403
    %v571 = vunpack.c.l.b16 %v404
    %v572 = vunpack.c.l.b16 %v405
    %v573 = vunpack.c.l.b16 %v406
    %v574 = vunpack.c.l.b16 %v407
    %v575 = vunpack.c.l.b16 %v408
    %v576 = vunpack.c.l.b16 %v409
    %v577 = vunpack.c.l.b16 %v410
    %v578 = vunpack.c.l.b16 %v411
    %v579 = vpack.c.b16 %v500, %v499
    %v580 = vpack.c.b16 %v502, %v501
    %v581 = vpack.c.b16 %v504, %v503
    %v582 = vpack.c.b16 %v506, %v505
    %v583 = vpack.c.b16 %v508, %v507
    %v584 = vpack.c.b16 %v510, %v509
    %v585 = vpack.c.b16 %v512, %v511
    %v586 = vpack.c.b16 %v514, %v513
    %v587 = vpack.c.b16 %v516, %v515
    %v588 = vpack.c.b16 %v518, %v517
    %v589 = vpack.c.b16 %v520, %v519
    %v590 = vpack.c.b16 %v522, %v521
    %v591 = vpack.c.b16 %v524, %v523
    %v592 = vpack.c.b16 %v526, %v525
    %v593 = vpack.c.b16 %v528, %v527
    %v594 = vpack.c.b16 %v530, %v529
    %v595 = vpack.c.b16 %v532, %v531
    %v596 = vpack.c.b16 %v534, %v533
    %v597 = vpack.c.b16 %v536, %v535
    %v598 = vpack.c.b16 %v538, %v537
    %v599 = vpack.c.b16 %v540, %v539
    %v600 = vpack.c.b16 %v542, %v541
    %v601 = vpack.c.b16 %v544, %v543
    %v602 = vpack.c.b16 %v546, %v545
    %v603 = vpack.c.b16 %v548, %v547
    %v604 = vpack.c.b16 %v550, %v549
    %v605 = vpack.c.b16 %v552, %v551
    %v606 = vpack.c.b16 %v554, %v553
    %v607 = vpack.c.b16 %v556, %v555
    %v608 = vpack.c.b16 %v558, %v557
    %v609 = vpack.c.b16 %v560, %v559
    %v610 = vpack.c.b16 %v562, %v561
    %v611 = vpack.c.b16 %v564, %v563
    %v612 = vpack.c.b16 %v566, %v565
    %v613 = vpack.c.b16 %v568, %v567
    %v614 = vpack.c.b16 %v570, %v569
    %v615 = vpack.c.b16 %v572, %v571
    %v616 = vpack.c.b16 %v574, %v573
    %v617 = vpack.c.b16 %v576, %v575
    %v618 = vpack.c.b16 %v578, %v577
    %659 = vmatprep.subr.bf16.mxu0 0
    %660 = vmatpush1.bf16.msra.mxu0 %v579
    %661 = vmatprep.subr.bf16.mxu0 0
    %662 = vmatpush1.bf16.msra.mxu0 %v580
    %663 = vmatprep.subr.bf16.mxu0 0
    %664 = vmatpush1.bf16.msra.mxu0 %v581
    %665 = vmatprep.subr.bf16.mxu0 0
    %666 = vmatpush1.bf16.msra.mxu0 %v582
    %667 = vmatprep.subr.bf16.mxu0 0
    %668 = vmatpush1.bf16.msra.mxu0 %v583
    %669 = vmatprep.subr.bf16.mxu0 0
    %670 = vmatpush1.bf16.msra.mxu0 %v584
    %671 = vmatprep.subr.bf16.mxu0 0
    %672 = vmatpush1.bf16.msra.mxu0 %v585
    %673 = vmatprep.subr.bf16.mxu0 0
    %674 = vmatpush1.bf16.msra.mxu0 %v586
    %675 = vmatprep.subr.bf16.mxu0 0
    %676 = vmatpush1.bf16.msra.mxu0 %v587
    %677 = vmatprep.subr.bf16.mxu0 0
    %678 = vmatpush1.bf16.msra.mxu0 %v588
    %679 = vmatprep.subr.bf16.mxu0 0
    %680 = vmatpush1.bf16.msra.mxu0 %v589
    %681 = vmatprep.subr.bf16.mxu0 0
    %682 = vmatpush1.bf16.msra.mxu0 %v590
    %683 = vmatprep.subr.bf16.mxu0 0
    %684 = vmatpush1.bf16.msra.mxu0 %v591
    %685 = vmatprep.subr.bf16.mxu0 0
    %686 = vmatpush1.bf16.msra.mxu0 %v592
    %687 = vmatprep.subr.bf16.mxu0 0
    %688 = vmatpush1.bf16.msra.mxu0 %v593
    %689 = vmatprep.subr.bf16.mxu0 0
    %690 = vmatpush1.bf16.msra.mxu0 %v594
    %691 = vmatprep.mubr.bf16.mxu0 %v171
    %692 = vmatmul.mubr.bf16.gmra.mrb[0].mxu0 %v151
    %v693 = vpop.f32.mrb[0].mxu0
    %v694 = vadd.f32 %v417, %v693
    %v695 = vpop.f32.mrb[0].mxu0
    %v696 = vpop.f32.mrb[0].mxu0
    %v697 = vadd.f32 %v417, %v696
    %v698 = vpop.f32.mrb[0].mxu0
    %699 = vmatprep.mubr.bf16.mxu0 %v179
    %700 = vmatmul.mubr.bf16.gmra.mrb[0].mxu0 %v152
    %v701 = vpop.f32.mrb[0].mxu0
    %v702 = vadd.f32 %v417, %v701
    %v703 = vpop.f32.mrb[0].mxu0
    %v704 = vpop.f32.mrb[0].mxu0
    %v705 = vadd.f32 %v417, %v704
    %v706 = vpop.f32.mrb[0].mxu0
    %707 = vmatprep.mubr.bf16.mxu0 %v318
    %708 = vmatmul.mubr.bf16.gmra.mrb[0].mxu0 %v314
    %v709 = vpop.f32.mrb[0].mxu0
    %v710 = vadd.f32 %v417, %v709
    %v711 = vpop.f32.mrb[0].mxu0
    %v712 = vpop.f32.mrb[0].mxu0
    %v713 = vadd.f32 %v417, %v712
    %v714 = vpop.f32.mrb[0].mxu0
    %715 = vmatprep.mubr.bf16.mxu0 %v284
    %716 = vmatmul.mubr.bf16.gmra.mrb[0].mxu0 %v282
    %v717 = vpop.f32.mrb[0].mxu0
    %v718 = vadd.f32 %v417, %v717
    %v719 = vpop.f32.mrb[0].mxu0
    %v720 = vpop.f32.mrb[0].mxu0
    %v721 = vadd.f32 %v417, %v720
    %v722 = vpop.f32.mrb[0].mxu0
    %723 = vmatprep.mubr.bf16.mxu0 %v294
    %724 = vmatmul.mubr.bf16.gmra.mrb[0].mxu0 %v292
    %v725 = vpop.f32.mrb[0].mxu0
    %v726 = vadd.f32 %v417, %v725
    %v727 = vpop.f32.mrb[0].mxu0
    %v728 = vpop.f32.mrb[0].mxu0
    %v729 = vadd.f32 %v417, %v728
    %v730 = vpop.f32.mrb[0].mxu0
    %731 = vdwg.mxu0
    %732 = vmatprep.subr.bf16.mxu0 0
    %733 = vmatpush1.bf16.msra.mxu0 %v595
    %734 = vmatprep.subr.bf16.mxu0 0
    %735 = vmatpush1.bf16.msra.mxu0 %v596
    %736 = vmatprep.subr.bf16.mxu0 0
    %737 = vmatpush1.bf16.msra.mxu0 %v597
    %738 = vmatprep.subr.bf16.mxu0 0
    %739 = vmatpush1.bf16.msra.mxu0 %v598
    %740 = vmatprep.subr.bf16.mxu0 0
    %741 = vmatpush1.bf16.msra.mxu0 %v599
    %742 = vmatprep.subr.bf16.mxu0 0
    %743 = vmatpush1.bf16.msra.mxu0 %v600
    %744 = vmatprep.subr.bf16.mxu0 0
    %745 = vmatpush1.bf16.msra.mxu0 %v601
    %746 = vmatprep.subr.bf16.mxu0 0
    %747 = vmatpush1.bf16.msra.mxu0 %v602
    %748 = vmatprep.subr.bf16.mxu0 0
    %749 = vmatpush1.bf16.msra.mxu0 %v603
    %750 = vmatprep.subr.bf16.mxu0 0
    %751 = vmatpush1.bf16.msra.mxu0 %v604
    %752 = vmatprep.subr.bf16.mxu0 0
    %753 = vmatpush1.bf16.msra.mxu0 %v605
    %754 = vmatprep.subr.bf16.mxu0 0
    %755 = vmatpush1.bf16.msra.mxu0 %v606
    %756 = vmatprep.subr.bf16.mxu0 0
    %757 = vmatpush1.bf16.msra.mxu0 %v607
    %758 = vmatprep.subr.bf16.mxu0 0
    %759 = vmatpush1.bf16.msra.mxu0 %v608
    %760 = vmatprep.subr.bf16.mxu0 0
    %761 = vmatpush1.bf16.msra.mxu0 %v609
    %762 = vmatprep.subr.bf16.mxu0 0
    %763 = vmatpush1.bf16.msra.mxu0 %v610
    %764 = vmatprep.mubr.bf16.mxu0 %v200
    %765 = vmatmul.mubr.bf16.gmra.mrb[0].mxu0 %v188
    %v766 = vpop.f32.mrb[0].mxu0
    %v767 = vadd.f32 %v694, %v766
    %v768 = vpop.f32.mrb[0].mxu0
    %v769 = vpop.f32.mrb[0].mxu0
    %v770 = vadd.f32 %v697, %v769
    %v771 = vpop.f32.mrb[0].mxu0
    %772 = vmatprep.mubr.bf16.mxu0 %v204
    %773 = vmatmul.mubr.bf16.gmra.mrb[0].mxu0 %v190
    %v774 = vpop.f32.mrb[0].mxu0
    %v775 = vadd.f32 %v702, %v774
    %v776 = vpop.f32.mrb[0].mxu0
    %v777 = vpop.f32.mrb[0].mxu0
    %v778 = vadd.f32 %v705, %v777
    %v779 = vpop.f32.mrb[0].mxu0
    %780 = vmatprep.mubr.bf16.mxu0 %v326
    %781 = vmatmul.mubr.bf16.gmra.mrb[0].mxu0 %v322
    %v782 = vpop.f32.mrb[0].mxu0
    %v783 = vadd.f32 %v710, %v782
    %v784 = vpop.f32.mrb[0].mxu0
    %v785 = vpop.f32.mrb[0].mxu0
    %v786 = vadd.f32 %v713, %v785
    %v787 = vpop.f32.mrb[0].mxu0
    %788 = vmatprep.mubr.bf16.mxu0 %v288
    %789 = vmatmul.mubr.bf16.gmra.mrb[0].mxu0 %v286
    %v790 = vpop.f32.mrb[0].mxu0
    %v791 = vadd.f32 %v718, %v790
    %v792 = vpop.f32.mrb[0].mxu0
    %v793 = vpop.f32.mrb[0].mxu0
    %v794 = vadd.f32 %v721, %v793
    %v795 = vpop.f32.mrb[0].mxu0
    %796 = vmatprep.mubr.bf16.mxu0 %v298
    %797 = vmatmul.mubr.bf16.gmra.mrb[0].mxu0 %v296
    %v798 = vpop.f32.mrb[0].mxu0
    %v799 = vadd.f32 %v726, %v798
    %v800 = vpop.f32.mrb[0].mxu0
    %v801 = vpop.f32.mrb[0].mxu0
    %v802 = vadd.f32 %v729, %v801
    %v803 = vpop.f32.mrb[0].mxu0
    %804 = vdwg.mxu0
    %805 = vmatprep.subr.bf16.mxu0 0
    %806 = vmatpush1.bf16.msra.mxu0 %v611
    %807 = vmatprep.subr.bf16.mxu0 0
    %808 = vmatpush1.bf16.msra.mxu0 %v612
    %809 = vmatprep.subr.bf16.mxu0 0
    %810 = vmatpush1.bf16.msra.mxu0 %v613
    %811 = vmatprep.subr.bf16.mxu0 0
    %812 = vmatpush1.bf16.msra.mxu0 %v614
    %813 = vmatprep.subr.bf16.mxu0 0
    %814 = vmatpush1.bf16.msra.mxu0 %v615
    %815 = vmatprep.subr.bf16.mxu0 0
    %816 = vmatpush1.bf16.msra.mxu0 %v616
    %817 = vmatprep.subr.bf16.mxu0 0
    %818 = vmatpush1.bf16.msra.mxu0 %v617
    %819 = vmatprep.subr.bf16.mxu0 0
    %820 = vmatpush1.bf16.msra.mxu0 %v618
    %821 = vmatprep.subr.bf16.mxu0 0
    %822 = vmatpush1.bf16.msra.mxu0 0
    %823 = vmatprep.subr.bf16.mxu0 0
    %824 = vmatpush1.bf16.msra.mxu0 0
    %825 = vmatprep.subr.bf16.mxu0 0
    %826 = vmatpush1.bf16.msra.mxu0 0
    %827 = vmatprep.subr.bf16.mxu0 0
    %828 = vmatpush1.bf16.msra.mxu0 0
    %829 = vmatprep.subr.bf16.mxu0 0
    %830 = vmatpush1.bf16.msra.mxu0 0
    %831 = vmatprep.subr.bf16.mxu0 0
    %832 = vmatpush1.bf16.msra.mxu0 0
    %833 = vmatprep.subr.bf16.mxu0 0
    %834 = vmatpush1.bf16.msra.mxu0 0
    %835 = vmatprep.subr.bf16.mxu0 0
    %836 = vmatpush1.bf16.msra.mxu0 0
    %837 = vmatprep.mubr.bf16.mxu0 0
    %838 = vmatmul.mubr.bf16.gmra.mrb[0].mxu0 %v210
    %v839 = vpop.f32.mrb[0].mxu0
    %v840 = vadd.f32 %v767, %v839
    %v841 = vpop.f32.mrb[0].mxu0
    %v842 = vpop.f32.mrb[0].mxu0
    %v843 = vadd.f32 %v770, %v842
    %v844 = vpop.f32.mrb[0].mxu0
    %845 = vmatprep.mubr.bf16.mxu0 0
    %846 = vmatmul.mubr.bf16.gmra.mrb[0].mxu0 %v212
    %v847 = vpop.f32.mrb[0].mxu0
    %v848 = vadd.f32 %v775, %v847
    %v849 = vpop.f32.mrb[0].mxu0
    %v850 = vpop.f32.mrb[0].mxu0
    %v851 = vadd.f32 %v778, %v850
    %v852 = vpop.f32.mrb[0].mxu0
    %853 = vmatprep.mubr.bf16.mxu0 0
    %854 = vmatmul.mubr.bf16.gmra.mrb[0].mxu0 %v330
    %v855 = vpop.f32.mrb[0].mxu0
    %v856 = vadd.f32 %v783, %v855
    %v857 = vpop.f32.mrb[0].mxu0
    %v858 = vpop.f32.mrb[0].mxu0
    %v859 = vadd.f32 %v786, %v858
    %v860 = vpop.f32.mrb[0].mxu0
    %861 = vmatprep.mubr.bf16.mxu0 0
    %862 = vmatmul.mubr.bf16.gmra.mrb[0].mxu0 %v290
    %v863 = vpop.f32.mrb[0].mxu0
    %v864 = vadd.f32 %v791, %v863
    %v865 = vpop.f32.mrb[0].mxu0
    %v866 = vpop.f32.mrb[0].mxu0
    %v867 = vadd.f32 %v794, %v866
    %v868 = vpop.f32.mrb[0].mxu0
    %869 = vmatprep.mubr.bf16.mxu0 0
    %870 = vmatmul.mubr.bf16.gmra.mrb[0].mxu0 %v300
    %v871 = vpop.f32.mrb[0].mxu0
    %v872 = vadd.f32 %v799, %v871
    %v873 = vpop.f32.mrb[0].mxu0
    %v874 = vpop.f32.mrb[0].mxu0
    %v875 = vadd.f32 %v802, %v874
    %v876 = vpop.f32.mrb[0].mxu0
    %877 = vdwg.mxu0
    %v878 = vmax.f32 %v840, 0.0
    %v879 = vmax.f32 %v843, 0.0
    %v880 = vmax.f32 %v848, 0.0
    %v881 = vmax.f32 %v851, 0.0
    %v882 = vmax.f32 %v856, 0.0
    %v883 = vmax.f32 %v859, 0.0
    %v884 = vmax.f32 %v864, 0.0
    %v885 = vmax.f32 %v867, 0.0
    %v886 = vmax.f32 %v872, 0.0
    %v887 = vmax.f32 %v875, 0.0
    %v888 = vpack.c.bf16 %v879, %v878
    %v889 = vpack.c.bf16 %v881, %v880
    %v890 = vpack.c.bf16 %v883, %v882
    %v891 = vpack.c.bf16 %v885, %v884
    %v892 = vpack.c.bf16 %v887, %v886
    %v896 = vrot.slane %v888, 1
    %v897 = vrot.slane %v889, 1
    %v898 = vsel %vm185, %v896, %v897
    %v899 = vrot.slane %v890, 1
    %v900 = vsel %vm185, %v897, %v899
    %v903 = vrot.slane %v888, 2
    %v904 = vrot.slane %v889, 2
    %v905 = vsel %vm207, %v903, %v904
    %v906 = vrot.slane %v890, 2
    %v907 = vsel %vm207, %v904, %v906
    %v912 = vrot.slane %v891, 1
    %v913 = vsel %vm185, %v899, %v912
    %v914 = vrot.slane %v892, 1
    %v915 = vsel %vm185, %v912, %v914
    %v916 = vrot.slane %v891, 2
    %v917 = vsel %vm207, %v906, %v916
    %v918 = vrot.slane %v892, 2
    %v919 = vsel %vm207, %v916, %v918
    %v920 = vrot.slane %v890, 4
    %v921 = vrot.slane %v891, 4
    %v922 = vsel %vm275, %v920, %v921
    %v923 = vrot.slane %v913, 4
    %v924 = vrot.slane %v915, 4
    %v925 = vsel %vm275, %v923, %v924
    %v926 = vrot.slane %v917, 4
    %v927 = vrot.slane %v919, 4
    %v928 = vsel %vm275, %v926, %v927
    %v929 = vrot.slane %v892, 4
    %v930 = vsel %vm275, %v921, %v929
    %v931 = vrot.slane %v914, 4
    %v932 = vsel %vm275, %v924, %v931
    %v933 = vrot.slane %v918, 4
    %v934 = vsel %vm275, %v927, %v933
    %v941 = vld [vmem:[#allocation2] sm:$0xf]
    %v942 = vld [vmem:[#allocation2 + $0x4] sm:$0xf]
    %v943 = vld [vmem:[#allocation2 + $0x8] sm:$0xf]
    %v944 = vld [vmem:[#allocation2 + $0xc] sm:$0xf]
    %v945 = vld [vmem:[#allocation2 + $0x10] sm:$0xf]
    %v946 = vld [vmem:[#allocation2 + $0x14] sm:$0xf]
    %v947 = vld [vmem:[#allocation2 + $0x18] sm:$0xf]
    %v948 = vld [vmem:[#allocation2 + $0x1c] sm:$0xf]
    %v949 = vld [vmem:[#allocation2 + $0x20] sm:$0xf]
    %v950 = vld [vmem:[#allocation2 + $0x24] sm:$0xf]
    %v951 = vld [vmem:[#allocation2 + $0x28] sm:$0xf]
    %v952 = vld [vmem:[#allocation2 + $0x2c] sm:$0xf]
    %v953 = vld [vmem:[#allocation2 + $0x30] sm:$0xf]
    %v954 = vld [vmem:[#allocation2 + $0x34] sm:$0xf]
    %v955 = vld [vmem:[#allocation2 + $0x38] sm:$0xf]
    %v956 = vld [vmem:[#allocation2 + $0x3c] sm:$0xf]
    %v957 = vld [vmem:[#allocation2 + $0x40] sm:$0xf]
    %v958 = vld [vmem:[#allocation2 + $0x44] sm:$0xf]
    %v959 = vld [vmem:[#allocation2 + $0x48] sm:$0xf]
    %v960 = vld [vmem:[#allocation2 + $0x4c] sm:$0xf]
    %v961 = vld [vmem:[#allocation2 + $0x50] sm:$0xf]
    %v962 = vld [vmem:[#allocation2 + $0x54] sm:$0xf]
    %v963 = vld [vmem:[#allocation2 + $0x58] sm:$0xf]
    %v964 = vld [vmem:[#allocation2 + $0x5c] sm:$0xf]
    %v965 = vld [vmem:[#allocation2 + $0x60] sm:$0xf]
    %v966 = vld [vmem:[#allocation2 + $0x64] sm:$0xf]
    %v967 = vld [vmem:[#allocation2 + $0x68] sm:$0xf]
    %v968 = vld [vmem:[#allocation2 + $0x6c] sm:$0xf]
    %v969 = vld [vmem:[#allocation2 + $0x70] sm:$0xf]
    %v970 = vld [vmem:[#allocation2 + $0x74] sm:$0xf]
    %v971 = vld [vmem:[#allocation2 + $0x78] sm:$0xf]
    %v972 = vld [vmem:[#allocation2 + $0x7c] sm:$0xf]
    %v973 = vld [vmem:[#allocation2 + $0x80] sm:$0xf]
    %v974 = vld [vmem:[#allocation2 + $0x84] sm:$0xf]
    %v975 = vld [vmem:[#allocation2 + $0x88] sm:$0xf]
    %v976 = vld [vmem:[#allocation2 + $0x8c] sm:$0xf]
    %v977 = vld [vmem:[#allocation2 + $0x90] sm:$0xf]
    %v978 = vld [vmem:[#allocation2 + $0x94] sm:$0xf]
    %v979 = vld [vmem:[#allocation2 + $0x98] sm:$0xf]
    %v980 = vld [vmem:[#allocation2 + $0x9c] sm:$0xf]
    %v981 = vld [vmem:[#allocation2 + $0xa0] sm:$0xf]
    %v982 = vld [vmem:[#allocation2 + $0xa4] sm:$0xf]
    %v983 = vld [vmem:[#allocation2 + $0xa8] sm:$0xf]
    %v984 = vld [vmem:[#allocation2 + $0xac] sm:$0xf]
    %v985 = vld [vmem:[#allocation2 + $0xb0] sm:$0xf]
    %v986 = vld [vmem:[#allocation2 + $0xb4] sm:$0xf]
    %v987 = vld [vmem:[#allocation2 + $0xb8] sm:$0xf]
    %v988 = vld [vmem:[#allocation2 + $0xbc] sm:$0xf]
    %v989 = vld [vmem:[%s4] sm:$0x1]
    %v991 = vlaneseq
    %v992 = vshrl.u32 %v991, 7
    %v993 = vsub.s32 0, %v992
    %v994 = vrot.slane %v989, %v993
    %v1044 = vunpack.c.l.b16 %v941
    %v1045 = vunpack.c.l.b16 %v942
    %v1046 = vunpack.c.l.b16 %v943
    %v1047 = vunpack.c.l.b16 %v944
    %v1048 = vunpack.c.l.b16 %v945
    %v1049 = vunpack.c.l.b16 %v946
    %v1050 = vunpack.c.l.b16 %v947
    %v1051 = vunpack.c.l.b16 %v948
    %v1052 = vunpack.c.l.b16 %v949
    %v1053 = vunpack.c.l.b16 %v950
    %v1054 = vunpack.c.l.b16 %v951
    %v1055 = vunpack.c.l.b16 %v952
    %v1056 = vunpack.c.l.b16 %v953
    %v1057 = vunpack.c.l.b16 %v954
    %v1058 = vunpack.c.l.b16 %v955
    %v1059 = vunpack.c.l.b16 %v956
    %v1060 = vunpack.c.l.b16 %v957
    %v1061 = vunpack.c.l.b16 %v958
    %v1062 = vunpack.c.l.b16 %v959
    %v1063 = vunpack.c.l.b16 %v960
    %v1064 = vunpack.c.l.b16 %v961
    %v1065 = vunpack.c.l.b16 %v962
    %v1066 = vunpack.c.l.b16 %v963
    %v1067 = vunpack.c.l.b16 %v964
    %v1068 = vunpack.c.l.b16 %v965
    %v1069 = vunpack.c.l.b16 %v966
    %v1070 = vunpack.c.l.b16 %v967
    %v1071 = vunpack.c.l.b16 %v968
    %v1072 = vunpack.c.l.b16 %v969
    %v1073 = vunpack.c.l.b16 %v970
    %v1074 = vunpack.c.l.b16 %v971
    %v1075 = vunpack.c.l.b16 %v972
    %v1076 = vunpack.c.l.b16 %v973
    %v1077 = vunpack.c.l.b16 %v974
    %v1078 = vunpack.c.l.b16 %v975
    %v1079 = vunpack.c.l.b16 %v976
    %v1080 = vunpack.c.l.b16 %v977
    %v1081 = vunpack.c.l.b16 %v978
    %v1082 = vunpack.c.l.b16 %v979
    %v1083 = vunpack.c.l.b16 %v980
    %v1084 = vunpack.c.l.b16 %v981
    %v1085 = vunpack.c.l.b16 %v982
    %v1086 = vunpack.c.l.b16 %v983
    %v1087 = vunpack.c.l.b16 %v984
    %v1088 = vunpack.c.l.b16 %v985
    %v1089 = vunpack.c.l.b16 %v986
    %v1090 = vunpack.c.l.b16 %v987
    %v1091 = vunpack.c.l.b16 %v988
    %v1092 = vpack.c.b16 %v1045, %v1044
    %v1093 = vpack.c.b16 %v1047, %v1046
    %v1094 = vpack.c.b16 %v1049, %v1048
    %v1095 = vpack.c.b16 %v1051, %v1050
    %v1096 = vpack.c.b16 %v1053, %v1052
    %v1097 = vpack.c.b16 %v1055, %v1054
    %v1098 = vpack.c.b16 %v1057, %v1056
    %v1099 = vpack.c.b16 %v1059, %v1058
    %v1100 = vpack.c.b16 %v1061, %v1060
    %v1101 = vpack.c.b16 %v1063, %v1062
    %v1102 = vpack.c.b16 %v1065, %v1064
    %v1103 = vpack.c.b16 %v1067, %v1066
    %v1104 = vpack.c.b16 %v1069, %v1068
    %v1105 = vpack.c.b16 %v1071, %v1070
    %v1106 = vpack.c.b16 %v1073, %v1072
    %v1107 = vpack.c.b16 %v1075, %v1074
    %v1108 = vpack.c.b16 %v1077, %v1076
    %v1109 = vpack.c.b16 %v1079, %v1078
    %v1110 = vpack.c.b16 %v1081, %v1080
    %v1111 = vpack.c.b16 %v1083, %v1082
    %v1112 = vpack.c.b16 %v1085, %v1084
    %v1113 = vpack.c.b16 %v1087, %v1086
    %v1114 = vpack.c.b16 %v1089, %v1088
    %v1115 = vpack.c.b16 %v1091, %v1090
    %1140 = vmatprep.subr.bf16.mxu0 0
    %1141 = vmatpush1.bf16.msra.mxu0 %v1092
    %1142 = vmatprep.subr.bf16.mxu0 0
    %1143 = vmatpush1.bf16.msra.mxu0 %v1093
    %1144 = vmatprep.subr.bf16.mxu0 0
    %1145 = vmatpush1.bf16.msra.mxu0 %v1094
    %1146 = vmatprep.subr.bf16.mxu0 0
    %1147 = vmatpush1.bf16.msra.mxu0 %v1095
    %1148 = vmatprep.subr.bf16.mxu0 0
    %1149 = vmatpush1.bf16.msra.mxu0 %v1096
    %1150 = vmatprep.subr.bf16.mxu0 0
    %1151 = vmatpush1.bf16.msra.mxu0 %v1097
    %1152 = vmatprep.subr.bf16.mxu0 0
    %1153 = vmatpush1.bf16.msra.mxu0 %v1098
    %1154 = vmatprep.subr.bf16.mxu0 0
    %1155 = vmatpush1.bf16.msra.mxu0 %v1099
    %1156 = vmatprep.subr.bf16.mxu0 0
    %1157 = vmatpush1.bf16.msra.mxu0 %v1100
    %1158 = vmatprep.subr.bf16.mxu0 0
    %1159 = vmatpush1.bf16.msra.mxu0 %v1101
    %1160 = vmatprep.subr.bf16.mxu0 0
    %1161 = vmatpush1.bf16.msra.mxu0 %v1102
    %1162 = vmatprep.subr.bf16.mxu0 0
    %1163 = vmatpush1.bf16.msra.mxu0 %v1103
    %1164 = vmatprep.subr.bf16.mxu0 0
    %1165 = vmatpush1.bf16.msra.mxu0 %v1104
    %1166 = vmatprep.subr.bf16.mxu0 0
    %1167 = vmatpush1.bf16.msra.mxu0 %v1105
    %1168 = vmatprep.subr.bf16.mxu0 0
    %1169 = vmatpush1.bf16.msra.mxu0 %v1106
    %1170 = vmatprep.subr.bf16.mxu0 0
    %1171 = vmatpush1.bf16.msra.mxu0 %v1107
    %1172 = vmatprep.mubr.bf16.mxu0 %v898
    %1173 = vmatmul.mubr.bf16.gmra.mrb[0].mxu0 %v888
    %v1174 = vpop.f32.mrb[0].mxu0
    %v1175 = vadd.f32 %v994, %v1174
    %v1176 = vpop.f32.mrb[0].mxu0
    %v1177 = vpop.f32.mrb[0].mxu0
    %v1178 = vadd.f32 %v994, %v1177
    %v1179 = vpop.f32.mrb[0].mxu0
    %1180 = vmatprep.mubr.bf16.mxu0 %v900
    %1181 = vmatmul.mubr.bf16.gmra.mrb[0].mxu0 %v889
    %v1182 = vpop.f32.mrb[0].mxu0
    %v1183 = vadd.f32 %v994, %v1182
    %v1184 = vpop.f32.mrb[0].mxu0
    %v1185 = vpop.f32.mrb[0].mxu0
    %v1186 = vadd.f32 %v994, %v1185
    %v1187 = vpop.f32.mrb[0].mxu0
    %1188 = vmatprep.mubr.bf16.mxu0 %v925
    %1189 = vmatmul.mubr.bf16.gmra.mrb[0].mxu0 %v922
    %v1190 = vpop.f32.mrb[0].mxu0
    %v1191 = vadd.f32 %v994, %v1190
    %v1192 = vpop.f32.mrb[0].mxu0
    %v1193 = vpop.f32.mrb[0].mxu0
    %v1194 = vadd.f32 %v994, %v1193
    %v1195 = vpop.f32.mrb[0].mxu0
    %1196 = vmatprep.mubr.bf16.mxu0 %v932
    %1197 = vmatmul.mubr.bf16.gmra.mrb[0].mxu0 %v930
    %v1198 = vpop.f32.mrb[0].mxu0
    %v1199 = vadd.f32 %v994, %v1198
    %v1200 = vpop.f32.mrb[0].mxu0
    %v1201 = vpop.f32.mrb[0].mxu0
    %v1202 = vadd.f32 %v994, %v1201
    %v1203 = vpop.f32.mrb[0].mxu0
    %1204 = vdwg.mxu0
    %1205 = vmatprep.subr.bf16.mxu0 0
    %1206 = vmatpush1.bf16.msra.mxu0 %v1108
    %1207 = vmatprep.subr.bf16.mxu0 0
    %1208 = vmatpush1.bf16.msra.mxu0 %v1109
    %1209 = vmatprep.subr.bf16.mxu0 0
    %1210 = vmatpush1.bf16.msra.mxu0 %v1110
    %1211 = vmatprep.subr.bf16.mxu0 0
    %1212 = vmatpush1.bf16.msra.mxu0 %v1111
    %1213 = vmatprep.subr.bf16.mxu0 0
    %1214 = vmatpush1.bf16.msra.mxu0 %v1112
    %1215 = vmatprep.subr.bf16.mxu0 0
    %1216 = vmatpush1.bf16.msra.mxu0 %v1113
    %1217 = vmatprep.subr.bf16.mxu0 0
    %1218 = vmatpush1.bf16.msra.mxu0 %v1114
    %1219 = vmatprep.subr.bf16.mxu0 0
    %1220 = vmatpush1.bf16.msra.mxu0 %v1115
    %1221 = vmatprep.subr.bf16.mxu0 0
    %1222 = vmatpush1.bf16.msra.mxu0 0
    %1223 = vmatprep.subr.bf16.mxu0 0
    %1224 = vmatpush1.bf16.msra.mxu0 0
    %1225 = vmatprep.subr.bf16.mxu0 0
    %1226 = vmatpush1.bf16.msra.mxu0 0
    %1227 = vmatprep.subr.bf16.mxu0 0
    %1228 = vmatpush1.bf16.msra.mxu0 0
    %1229 = vmatprep.subr.bf16.mxu0 0
    %1230 = vmatpush1.bf16.msra.mxu0 0
    %1231 = vmatprep.subr.bf16.mxu0 0
    %1232 = vmatpush1.bf16.msra.mxu0 0
    %1233 = vmatprep.subr.bf16.mxu0 0
    %1234 = vmatpush1.bf16.msra.mxu0 0
    %1235 = vmatprep.subr.bf16.mxu0 0
    %1236 = vmatpush1.bf16.msra.mxu0 0
    %1237 = vmatprep.mubr.bf16.mxu0 0
    %1238 = vmatmul.mubr.bf16.gmra.mrb[0].mxu0 %v905
    %v1239 = vpop.f32.mrb[0].mxu0
    %v1240 = vadd.f32 %v1175, %v1239
    %v1241 = vpop.f32.mrb[0].mxu0
    %v1242 = vpop.f32.mrb[0].mxu0
    %v1243 = vadd.f32 %v1178, %v1242
    %v1244 = vpop.f32.mrb[0].mxu0
    %1245 = vmatprep.mubr.bf16.mxu0 0
    %1246 = vmatmul.mubr.bf16.gmra.mrb[0].mxu0 %v907
    %v1247 = vpop.f32.mrb[0].mxu0
    %v1248 = vadd.f32 %v1183, %v1247
    %v1249 = vpop.f32.mrb[0].mxu0
    %v1250 = vpop.f32.mrb[0].mxu0
    %v1251 = vadd.f32 %v1186, %v1250
    %v1252 = vpop.f32.mrb[0].mxu0
    %1253 = vmatprep.mubr.bf16.mxu0 0
    %1254 = vmatmul.mubr.bf16.gmra.mrb[0].mxu0 %v928
    %v1255 = vpop.f32.mrb[0].mxu0
    %v1256 = vadd.f32 %v1191, %v1255
    %v1257 = vpop.f32.mrb[0].mxu0
    %v1258 = vpop.f32.mrb[0].mxu0
    %v1259 = vadd.f32 %v1194, %v1258
    %v1260 = vpop.f32.mrb[0].mxu0
    %1261 = vmatprep.mubr.bf16.mxu0 0
    %1262 = vmatmul.mubr.bf16.gmra.mrb[0].mxu0 %v934
    %v1263 = vpop.f32.mrb[0].mxu0
    %v1264 = vadd.f32 %v1199, %v1263
    %v1265 = vpop.f32.mrb[0].mxu0
    %v1266 = vpop.f32.mrb[0].mxu0
    %v1267 = vadd.f32 %v1202, %v1266
    %v1268 = vpop.f32.mrb[0].mxu0
    %1269 = vdwg.mxu0
    %v1270 = vmax.f32 %v1240, 0.0
    %v1271 = vmax.f32 %v1243, 0.0
    %v1272 = vmax.f32 %v1248, 0.0
    %v1273 = vmax.f32 %v1251, 0.0
    %v1274 = vmax.f32 %v1256, 0.0
    %v1275 = vmax.f32 %v1259, 0.0
    %v1276 = vmax.f32 %v1264, 0.0
    %v1277 = vmax.f32 %v1267, 0.0
    %v1278 = vpack.c.bf16 %v1271, %v1270
    %v1279 = vpack.c.bf16 %v1273, %v1272
    %v1280 = vpack.c.bf16 %v1275, %v1274
    %v1281 = vpack.c.bf16 %v1277, %v1276
    %v1283 = vshrl.u32 %v1278, 16
    %v1285 = vrot.slane %v1283, 1
    %v1286 = vshll.u32 %v1278, 16
    %v1288 = vrot.slane %v1286, 2
    %v1289 = vor.u32 %v1285, %v1288
    %v1291 = vshrl.u32 %v1279, 16
    %v1293 = vrot.slane %v1291, 1
    %v1294 = vshll.u32 %v1279, 16
    %v1296 = vrot.slane %v1294, 2
    %v1297 = vor.u32 %v1293, %v1296
    %v1298 = vsel %vm193, %v1289, %v1297
    %vm1302 = vcmask 1044480
    %v1303 = vrot.slane %v1278, 3
    %v1304 = vrot.slane %v1279, 3
    %v1305 = vsel %vm1302, %v1303, %v1304
    %v1308 = vshrl.u32 %v1280, 16
    %v1310 = vrot.slane %v1308, 1
    %v1311 = vshll.u32 %v1280, 16
    %v1313 = vrot.slane %v1311, 2
    %v1314 = vor.u32 %v1310, %v1313
    %v1316 = vshrl.u32 %v1281, 16
    %v1318 = vrot.slane %v1316, 1
    %v1319 = vshll.u32 %v1281, 16
    %v1321 = vrot.slane %v1319, 2
    %v1322 = vor.u32 %v1318, %v1321
    %v1323 = vsel %vm193, %v1314, %v1322
    %v1326 = vrot.slane %v1280, 3
    %v1327 = vrot.slane %v1281, 3
    %v1328 = vsel %vm1302, %v1326, %v1327
    %v1329 = vrot.slane %v1280, 4
    %v1330 = vrot.slane %v1323, 4
    %v1331 = vrot.slane %v1328, 4
    %v1332 = vrot.slane %v1281, 4
    %v1333 = vsel %vm275, %v1329, %v1332
    %v1334 = vrot.slane %v1322, 4
    %v1335 = vsel %vm275, %v1330, %v1334
    %v1336 = vrot.slane %v1327, 4
    %v1337 = vsel %vm275, %v1331, %v1336
    %v1342 = vsel %vm311, %v1279, %v1329
    %v1346 = vsel %vm311, %v1297, %v1330
    %v1350 = vsel %vm311, %v1304, %v1331
    %v1352 = vld [vmem:[%s5] sm:$0xf]
    %v1353 = vld [vmem:[%s5 + $0x4] sm:$0xf]
    %v1354 = vld [vmem:[%s5 + $0x8] sm:$0xf]
    %v1355 = vld [vmem:[%s5 + $0xc] sm:$0xf]
    %v1356 = vld [vmem:[%s5 + $0x10] sm:$0xf]
    %v1357 = vld [vmem:[%s5 + $0x14] sm:$0xf]
    %v1358 = vld [vmem:[%s5 + $0x18] sm:$0xf]
    %v1359 = vld [vmem:[%s5 + $0x1c] sm:$0xf]
    %v1360 = vld [vmem:[%s5 + $0x20] sm:$0xf]
    %v1361 = vld [vmem:[%s5 + $0x24] sm:$0xf]
    %v1362 = vld [vmem:[%s5 + $0x28] sm:$0xf]
    %v1363 = vld [vmem:[%s5 + $0x2c] sm:$0xf]
    %v1364 = vld [vmem:[%s5 + $0x30] sm:$0xf]
    %v1365 = vld [vmem:[%s5 + $0x34] sm:$0xf]
    %v1366 = vld [vmem:[%s5 + $0x38] sm:$0xf]
    %v1367 = vld [vmem:[%s5 + $0x3c] sm:$0xf]
    %v1368 = vld [vmem:[%s5 + $0x40] sm:$0xf]
    %v1369 = vld [vmem:[%s5 + $0x44] sm:$0xf]
    %v1370 = vld [vmem:[%s5 + $0x48] sm:$0xf]
    %v1371 = vld [vmem:[%s5 + $0x4c] sm:$0xf]
    %v1372 = vld [vmem:[%s5 + $0x50] sm:$0xf]
    %v1373 = vld [vmem:[%s5 + $0x54] sm:$0xf]
    %v1374 = vld [vmem:[%s5 + $0x58] sm:$0xf]
    %v1375 = vld [vmem:[%s5 + $0x5c] sm:$0xf]
    %v1376 = vld [vmem:[%s5 + $0x60] sm:$0xf]
    %v1377 = vld [vmem:[%s5 + $0x64] sm:$0xf]
    %v1378 = vld [vmem:[%s5 + $0x68] sm:$0xf]
    %v1379 = vld [vmem:[%s5 + $0x6c] sm:$0xf]
    %v1380 = vld [vmem:[%s5 + $0x70] sm:$0xf]
    %v1381 = vld [vmem:[%s5 + $0x74] sm:$0xf]
    %v1382 = vld [vmem:[%s5 + $0x78] sm:$0xf]
    %v1383 = vld [vmem:[%s5 + $0x7c] sm:$0xf]
    %v1384 = vld [vmem:[%s5 + $0x80] sm:$0xf]
    %v1385 = vld [vmem:[%s5 + $0x84] sm:$0xf]
    %v1386 = vld [vmem:[%s5 + $0x88] sm:$0xf]
    %v1387 = vld [vmem:[%s5 + $0x8c] sm:$0xf]
    %v1388 = vld [vmem:[%s5 + $0x90] sm:$0xf]
    %v1389 = vld [vmem:[%s5 + $0x94] sm:$0xf]
    %v1390 = vld [vmem:[%s5 + $0x98] sm:$0xf]
    %v1391 = vld [vmem:[%s5 + $0x9c] sm:$0xf]
    %v1392 = vld [vmem:[%s5 + $0xa0] sm:$0xf]
    %v1393 = vld [vmem:[%s5 + $0xa4] sm:$0xf]
    %v1394 = vld [vmem:[%s5 + $0xa8] sm:$0xf]
    %v1395 = vld [vmem:[%s5 + $0xac] sm:$0xf]
    %v1396 = vld [vmem:[%s5 + $0xb0] sm:$0xf]
    %v1397 = vld [vmem:[%s5 + $0xb4] sm:$0xf]
    %v1398 = vld [vmem:[%s5 + $0xb8] sm:$0xf]
    %v1399 = vld [vmem:[%s5 + $0xbc] sm:$0xf]
    %v1400 = vld [vmem:[%s6] sm:$0x1]
    %v1402 = vlaneseq
    %v1403 = vshrl.u32 %v1402, 7
    %v1404 = vsub.s32 0, %v1403
    %v1405 = vrot.slane %v1400, %v1404
    %v1455 = vunpack.c.l.b16 %v1352
    %v1456 = vunpack.c.l.b16 %v1353
    %v1457 = vunpack.c.l.b16 %v1354
    %v1458 = vunpack.c.l.b16 %v1355
    %v1459 = vunpack.c.l.b16 %v1356
    %v1460 = vunpack.c.l.b16 %v1357
    %v1461 = vunpack.c.l.b16 %v1358
    %v1462 = vunpack.c.l.b16 %v1359
    %v1463 = vunpack.c.l.b16 %v1360
    %v1464 = vunpack.c.l.b16 %v1361
    %v1465 = vunpack.c.l.b16 %v1362
    %v1466 = vunpack.c.l.b16 %v1363
    %v1467 = vunpack.c.l.b16 %v1364
    %v1468 = vunpack.c.l.b16 %v1365
    %v1469 = vunpack.c.l.b16 %v1366
    %v1470 = vunpack.c.l.b16 %v1367
    %v1471 = vunpack.c.l.b16 %v1368
    %v1472 = vunpack.c.l.b16 %v1369
    %v1473 = vunpack.c.l.b16 %v1370
    %v1474 = vunpack.c.l.b16 %v1371
    %v1475 = vunpack.c.l.b16 %v1372
    %v1476 = vunpack.c.l.b16 %v1373
    %v1477 = vunpack.c.l.b16 %v1374
    %v1478 = vunpack.c.l.b16 %v1375
    %v1479 = vunpack.c.l.b16 %v1376
    %v1480 = vunpack.c.l.b16 %v1377
    %v1481 = vunpack.c.l.b16 %v1378
    %v1482 = vunpack.c.l.b16 %v1379
    %v1483 = vunpack.c.l.b16 %v1380
    %v1484 = vunpack.c.l.b16 %v1381
    %v1485 = vunpack.c.l.b16 %v1382
    %v1486 = vunpack.c.l.b16 %v1383
    %v1487 = vunpack.c.l.b16 %v1384
    %v1488 = vunpack.c.l.b16 %v1385
    %v1489 = vunpack.c.l.b16 %v1386
    %v1490 = vunpack.c.l.b16 %v1387
    %v1491 = vunpack.c.l.b16 %v1388
    %v1492 = vunpack.c.l.b16 %v1389
    %v1493 = vunpack.c.l.b16 %v1390
    %v1494 = vunpack.c.l.b16 %v1391
    %v1495 = vunpack.c.l.b16 %v1392
    %v1496 = vunpack.c.l.b16 %v1393
    %v1497 = vunpack.c.l.b16 %v1394
    %v1498 = vunpack.c.l.b16 %v1395
    %v1499 = vunpack.c.l.b16 %v1396
    %v1500 = vunpack.c.l.b16 %v1397
    %v1501 = vunpack.c.l.b16 %v1398
    %v1502 = vunpack.c.l.b16 %v1399
    %v1503 = vpack.c.b16 %v1456, %v1455
    %v1504 = vpack.c.b16 %v1458, %v1457
    %v1505 = vpack.c.b16 %v1460, %v1459
    %v1506 = vpack.c.b16 %v1462, %v1461
    %v1507 = vpack.c.b16 %v1464, %v1463
    %v1508 = vpack.c.b16 %v1466, %v1465
    %v1509 = vpack.c.b16 %v1468, %v1467
    %v1510 = vpack.c.b16 %v1470, %v1469
    %v1511 = vpack.c.b16 %v1472, %v1471
    %v1512 = vpack.c.b16 %v1474, %v1473
    %v1513 = vpack.c.b16 %v1476, %v1475
    %v1514 = vpack.c.b16 %v1478, %v1477
    %v1515 = vpack.c.b16 %v1480, %v1479
    %v1516 = vpack.c.b16 %v1482, %v1481
    %v1517 = vpack.c.b16 %v1484, %v1483
    %v1518 = vpack.c.b16 %v1486, %v1485
    %v1519 = vpack.c.b16 %v1488, %v1487
    %v1520 = vpack.c.b16 %v1490, %v1489
    %v1521 = vpack.c.b16 %v1492, %v1491
    %v1522 = vpack.c.b16 %v1494, %v1493
    %v1523 = vpack.c.b16 %v1496, %v1495
    %v1524 = vpack.c.b16 %v1498, %v1497
    %v1525 = vpack.c.b16 %v1500, %v1499
    %v1526 = vpack.c.b16 %v1502, %v1501
    %1551 = vmatprep.subr.bf16.mxu0 0
    %1552 = vmatpush1.bf16.msra.mxu0 %v1503
    %1553 = vmatprep.subr.bf16.mxu0 0
    %1554 = vmatpush1.bf16.msra.mxu0 %v1504
    %1555 = vmatprep.subr.bf16.mxu0 0
    %1556 = vmatpush1.bf16.msra.mxu0 %v1505
    %1557 = vmatprep.subr.bf16.mxu0 0
    %1558 = vmatpush1.bf16.msra.mxu0 %v1506
    %1559 = vmatprep.subr.bf16.mxu0 0
    %1560 = vmatpush1.bf16.msra.mxu0 %v1507
    %1561 = vmatprep.subr.bf16.mxu0 0
    %1562 = vmatpush1.bf16.msra.mxu0 %v1508
    %1563 = vmatprep.subr.bf16.mxu0 0
    %1564 = vmatpush1.bf16.msra.mxu0 %v1509
    %1565 = vmatprep.subr.bf16.mxu0 0
    %1566 = vmatpush1.bf16.msra.mxu0 %v1510
    %1567 = vmatprep.subr.bf16.mxu0 0
    %1568 = vmatpush1.bf16.msra.mxu0 %v1511
    %1569 = vmatprep.subr.bf16.mxu0 0
    %1570 = vmatpush1.bf16.msra.mxu0 %v1512
    %1571 = vmatprep.subr.bf16.mxu0 0
    %1572 = vmatpush1.bf16.msra.mxu0 %v1513
    %1573 = vmatprep.subr.bf16.mxu0 0
    %1574 = vmatpush1.bf16.msra.mxu0 %v1514
    %1575 = vmatprep.subr.bf16.mxu0 0
    %1576 = vmatpush1.bf16.msra.mxu0 %v1515
    %1577 = vmatprep.subr.bf16.mxu0 0
    %1578 = vmatpush1.bf16.msra.mxu0 %v1516
    %1579 = vmatprep.subr.bf16.mxu0 0
    %1580 = vmatpush1.bf16.msra.mxu0 %v1517
    %1581 = vmatprep.subr.bf16.mxu0 0
    %1582 = vmatpush1.bf16.msra.mxu0 %v1518
    %1583 = vmatprep.mubr.bf16.mxu0 %v1298
    %1584 = vmatmul.mubr.bf16.gmra.mrb[0].mxu0 %v1278
    %v1585 = vpop.f32.mrb[0].mxu0
    %v1586 = vadd.f32 %v1405, %v1585
    %v1587 = vpop.f32.mrb[0].mxu0
    %v1588 = vpop.f32.mrb[0].mxu0
    %v1589 = vadd.f32 %v1405, %v1588
    %v1590 = vpop.f32.mrb[0].mxu0
    %1591 = vmatprep.mubr.bf16.mxu0 %v1346
    %1592 = vmatmul.mubr.bf16.gmra.mrb[0].mxu0 %v1342
    %v1593 = vpop.f32.mrb[0].mxu0
    %v1594 = vadd.f32 %v1405, %v1593
    %v1595 = vpop.f32.mrb[0].mxu0
    %v1596 = vpop.f32.mrb[0].mxu0
    %v1597 = vadd.f32 %v1405, %v1596
    %v1598 = vpop.f32.mrb[0].mxu0
    %1599 = vmatprep.mubr.bf16.mxu0 %v1335
    %1600 = vmatmul.mubr.bf16.gmra.mrb[0].mxu0 %v1333
    %v1601 = vpop.f32.mrb[0].mxu0
    %v1602 = vadd.f32 %v1405, %v1601
    %v1603 = vpop.f32.mrb[0].mxu0
    %v1604 = vpop.f32.mrb[0].mxu0
    %v1605 = vadd.f32 %v1405, %v1604
    %v1606 = vpop.f32.mrb[0].mxu0
    %1607 = vdwg.mxu0
    %1608 = vmatprep.subr.bf16.mxu0 0
    %1609 = vmatpush1.bf16.msra.mxu0 %v1519
    %1610 = vmatprep.subr.bf16.mxu0 0
    %1611 = vmatpush1.bf16.msra.mxu0 %v1520
    %1612 = vmatprep.subr.bf16.mxu0 0
    %1613 = vmatpush1.bf16.msra.mxu0 %v1521
    %1614 = vmatprep.subr.bf16.mxu0 0
    %1615 = vmatpush1.bf16.msra.mxu0 %v1522
    %1616 = vmatprep.subr.bf16.mxu0 0
    %1617 = vmatpush1.bf16.msra.mxu0 %v1523
    %1618 = vmatprep.subr.bf16.mxu0 0
    %1619 = vmatpush1.bf16.msra.mxu0 %v1524
    %1620 = vmatprep.subr.bf16.mxu0 0
    %1621 = vmatpush1.bf16.msra.mxu0 %v1525
    %1622 = vmatprep.subr.bf16.mxu0 0
    %1623 = vmatpush1.bf16.msra.mxu0 %v1526
    %1624 = vmatprep.subr.bf16.mxu0 0
    %1625 = vmatpush1.bf16.msra.mxu0 0
    %1626 = vmatprep.subr.bf16.mxu0 0
    %1627 = vmatpush1.bf16.msra.mxu0 0
    %1628 = vmatprep.subr.bf16.mxu0 0
    %1629 = vmatpush1.bf16.msra.mxu0 0
    %1630 = vmatprep.subr.bf16.mxu0 0
    %1631 = vmatpush1.bf16.msra.mxu0 0
    %1632 = vmatprep.subr.bf16.mxu0 0
    %1633 = vmatpush1.bf16.msra.mxu0 0
    %1634 = vmatprep.subr.bf16.mxu0 0
    %1635 = vmatpush1.bf16.msra.mxu0 0
    %1636 = vmatprep.subr.bf16.mxu0 0
    %1637 = vmatpush1.bf16.msra.mxu0 0
    %1638 = vmatprep.subr.bf16.mxu0 0
    %1639 = vmatpush1.bf16.msra.mxu0 0
    %1640 = vmatprep.mubr.bf16.mxu0 0
    %1641 = vmatmul.mubr.bf16.gmra.mrb[0].mxu0 %v1305
    %v1642 = vpop.f32.mrb[0].mxu0
    %v1643 = vadd.f32 %v1586, %v1642
    %v1644 = vpop.f32.mrb[0].mxu0
    %v1645 = vpop.f32.mrb[0].mxu0
    %v1646 = vadd.f32 %v1589, %v1645
    %v1647 = vpop.f32.mrb[0].mxu0
    %1648 = vmatprep.mubr.bf16.mxu0 0
    %1649 = vmatmul.mubr.bf16.gmra.mrb[0].mxu0 %v1350
    %v1650 = vpop.f32.mrb[0].mxu0
    %v1651 = vadd.f32 %v1594, %v1650
    %v1652 = vpop.f32.mrb[0].mxu0
    %v1653 = vpop.f32.mrb[0].mxu0
    %v1654 = vadd.f32 %v1597, %v1653
    %v1655 = vpop.f32.mrb[0].mxu0
    %1656 = vmatprep.mubr.bf16.mxu0 0
    %1657 = vmatmul.mubr.bf16.gmra.mrb[0].mxu0 %v1337
    %v1658 = vpop.f32.mrb[0].mxu0
    %v1659 = vadd.f32 %v1602, %v1658
    %v1660 = vpop.f32.mrb[0].mxu0
    %v1661 = vpop.f32.mrb[0].mxu0
    %v1662 = vadd.f32 %v1605, %v1661
    %v1663 = vpop.f32.mrb[0].mxu0
    %1664 = vdwg.mxu0
    %v1665 = vmax.f32 %v1643, 0.0
    %v1666 = vmax.f32 %v1646, 0.0
    %v1667 = vmax.f32 %v1651, 0.0
    %v1668 = vmax.f32 %v1654, 0.0
    %v1669 = vmax.f32 %v1659, 0.0
    %v1670 = vmax.f32 %v1662, 0.0
    %v1671 = vpack.c.bf16 %v1666, %v1665
    %v1672 = vpack.c.bf16 %v1668, %v1667
    %v1673 = vpack.c.bf16 %v1670, %v1669
    %v1676 = vld [vmem:[#allocation5] sm:$0xf]
    %v1677 = vld [vmem:[#allocation5 + $0x4] sm:$0xf]
    %v1678 = vld [vmem:[#allocation5 + $0x8] sm:$0xf]
    %v1679 = vld [vmem:[#allocation5 + $0xc] sm:$0xf]
    %v1680 = vld [vmem:[#allocation5 + $0x10] sm:$0xf]
    %v1681 = vld [vmem:[#allocation5 + $0x14] sm:$0xf]
    %v1682 = vld [vmem:[#allocation5 + $0x18] sm:$0xf]
    %v1683 = vld [vmem:[#allocation5 + $0x1c] sm:$0xf]
    %v1684 = vld [vmem:[#allocation5 + $0x20] sm:$0xf]
    %v1685 = vld [vmem:[#allocation5 + $0x24] sm:$0xf]
    %v1686 = vld [vmem:[#allocation5 + $0x28] sm:$0xf]
    %v1687 = vld [vmem:[#allocation5 + $0x2c] sm:$0xf]
    %v1688 = vld [vmem:[#allocation5 + $0x30] sm:$0xf]
    %v1689 = vld [vmem:[#allocation5 + $0x34] sm:$0xf]
    %v1690 = vld [vmem:[#allocation5 + $0x38] sm:$0xf]
    %v1691 = vld [vmem:[#allocation5 + $0x3c] sm:$0xf]
    %v1692 = vld [vmem:[%s8] sm:$0x1]
    %v1694 = vlaneseq
    %v1695 = vshrl.u32 %v1694, 7
    %v1696 = vsub.s32 0, %v1695
    %v1697 = vrot.slane %v1692, %v1696
    %v1715 = vunpack.c.l.b16 %v1676
    %v1716 = vunpack.c.l.b16 %v1677
    %v1717 = vunpack.c.l.b16 %v1678
    %v1718 = vunpack.c.l.b16 %v1679
    %v1719 = vunpack.c.l.b16 %v1680
    %v1720 = vunpack.c.l.b16 %v1681
    %v1721 = vunpack.c.l.b16 %v1682
    %v1722 = vunpack.c.l.b16 %v1683
    %v1723 = vunpack.c.l.b16 %v1684
    %v1724 = vunpack.c.l.b16 %v1685
    %v1725 = vunpack.c.l.b16 %v1686
    %v1726 = vunpack.c.l.b16 %v1687
    %v1727 = vunpack.c.l.b16 %v1688
    %v1728 = vunpack.c.l.b16 %v1689
    %v1729 = vunpack.c.l.b16 %v1690
    %v1730 = vunpack.c.l.b16 %v1691
    %v1731 = vpack.c.b16 %v1716, %v1715
    %v1732 = vpack.c.b16 %v1718, %v1717
    %v1733 = vpack.c.b16 %v1720, %v1719
    %v1734 = vpack.c.b16 %v1722, %v1721
    %v1735 = vpack.c.b16 %v1724, %v1723
    %v1736 = vpack.c.b16 %v1726, %v1725
    %v1737 = vpack.c.b16 %v1728, %v1727
    %v1738 = vpack.c.b16 %v1730, %v1729
    %1747 = vmatprep.subr.bf16.mxu0 0
    %1748 = vmatpush1.bf16.msra.mxu0 %v1731
    %1749 = vmatprep.subr.bf16.mxu0 0
    %1750 = vmatpush1.bf16.msra.mxu0 %v1732
    %1751 = vmatprep.subr.bf16.mxu0 0
    %1752 = vmatpush1.bf16.msra.mxu0 %v1733
    %1753 = vmatprep.subr.bf16.mxu0 0
    %1754 = vmatpush1.bf16.msra.mxu0 %v1734
    %1755 = vmatprep.subr.bf16.mxu0 0
    %1756 = vmatpush1.bf16.msra.mxu0 %v1735
    %1757 = vmatprep.subr.bf16.mxu0 0
    %1758 = vmatpush1.bf16.msra.mxu0 %v1736
    %1759 = vmatprep.subr.bf16.mxu0 0
    %1760 = vmatpush1.bf16.msra.mxu0 %v1737
    %1761 = vmatprep.subr.bf16.mxu0 0
    %1762 = vmatpush1.bf16.msra.mxu0 %v1738
    %1763 = vmatprep.subr.bf16.mxu0 0
    %1764 = vmatpush1.bf16.msra.mxu0 0
    %1765 = vmatprep.subr.bf16.mxu0 0
    %1766 = vmatpush1.bf16.msra.mxu0 0
    %1767 = vmatprep.subr.bf16.mxu0 0
    %1768 = vmatpush1.bf16.msra.mxu0 0
    %1769 = vmatprep.subr.bf16.mxu0 0
    %1770 = vmatpush1.bf16.msra.mxu0 0
    %1771 = vmatprep.subr.bf16.mxu0 0
    %1772 = vmatpush1.bf16.msra.mxu0 0
    %1773 = vmatprep.subr.bf16.mxu0 0
    %1774 = vmatpush1.bf16.msra.mxu0 0
    %1775 = vmatprep.subr.bf16.mxu0 0
    %1776 = vmatpush1.bf16.msra.mxu0 0
    %1777 = vmatprep.subr.bf16.mxu0 0
    %1778 = vmatpush1.bf16.msra.mxu0 0
    %1779 = vmatprep.mubr.bf16.mxu0 0
    %1780 = vmatmul.mubr.bf16.gmra.mrb[0].mxu0 %v1671
    %v1781 = vpop.f32.mrb[0].mxu0
    %v1782 = vadd.f32 %v1697, %v1781
    %v1783 = vpop.f32.mrb[0].mxu0
    %v1784 = vpop.f32.mrb[0].mxu0
    %v1785 = vadd.f32 %v1697, %v1784
    %v1786 = vpop.f32.mrb[0].mxu0
    %1787 = vmatprep.mubr.bf16.mxu0 0
    %1788 = vmatmul.mubr.bf16.gmra.mrb[0].mxu0 %v1672
    %v1789 = vpop.f32.mrb[0].mxu0
    %v1790 = vadd.f32 %v1697, %v1789
    %v1791 = vpop.f32.mrb[0].mxu0
    %v1792 = vpop.f32.mrb[0].mxu0
    %v1793 = vadd.f32 %v1697, %v1792
    %v1794 = vpop.f32.mrb[0].mxu0
    %1795 = vmatprep.mubr.bf16.mxu0 0
    %1796 = vmatmul.mubr.bf16.gmra.mrb[0].mxu0 %v1673
    %v1797 = vpop.f32.mrb[0].mxu0
    %v1798 = vadd.f32 %v1697, %v1797
    %v1799 = vpop.f32.mrb[0].mxu0
    %v1800 = vpop.f32.mrb[0].mxu0
    %v1801 = vadd.f32 %v1697, %v1800
    %v1802 = vpop.f32.mrb[0].mxu0
    %1803 = vdwg.mxu0
    %v1804 = vmax.f32 %v1782, 0.0
    %v1805 = vmax.f32 %v1785, 0.0
    %v1806 = vmax.f32 %v1790, 0.0
    %v1807 = vmax.f32 %v1793, 0.0
    %v1808 = vmax.f32 %v1798, 0.0
    %v1809 = vmax.f32 %v1801, 0.0
    %v1810 = vpack.c.bf16 %v1805, %v1804
    %v1811 = vpack.c.bf16 %v1807, %v1806
    %v1812 = vpack.c.bf16 %v1809, %v1808
    %v1815 = vld [vmem:[%s9] sm:$0xff]
    %v1816 = vld [vmem:[%s9 + $0x8] sm:$0xff]
    %v1817 = vld [vmem:[%s9 + $0x10] sm:$0xff]
    %v1818 = vld [vmem:[%s9 + $0x18] sm:$0xff]
    %v1819 = vld [vmem:[%s9 + $0x20] sm:$0xff]
    %v1820 = vld [vmem:[%s9 + $0x28] sm:$0xff]
    %v1821 = vld [vmem:[%s9 + $0x30] sm:$0xff]
    %v1822 = vld [vmem:[%s9 + $0x38] sm:$0xff]
    %v1823 = vld [vmem:[%s9 + $0x40] sm:$0xff]
    %v1824 = vld [vmem:[%s9 + $0x48] sm:$0xff]
    %v1825 = vld [vmem:[%s9 + $0x50] sm:$0xff]
    %v1826 = vld [vmem:[%s9 + $0x58] sm:$0xff]
    %v1827 = vld [vmem:[%s9 + $0x60] sm:$0xff]
    %v1828 = vld [vmem:[%s9 + $0x68] sm:$0xff]
    %v1829 = vld [vmem:[%s9 + $0x70] sm:$0xff]
    %v1830 = vld [vmem:[%s9 + $0x78] sm:$0xff]
    %v1831 = vld [vmem:[%s10] sm:$0x3]
    %v1833 = vlaneseq
    %v1834 = vshrl.u32 %v1833, 7
    %v1835 = vsub.s32 0, %v1834
    %v1836 = vrot.slane %v1831, %v1835
    %v1837 = vlaneseq
    %v1838 = vshrl.u32 %v1837, 7
    %v1839 = vsub.s32 1, %v1838
    %v1840 = vrot.slane %v1831, %v1839
    %v1859 = vunpack.c.l.b16 %v1815
    %v1860 = vunpack.c.h.b16 %v1815
    %v1861 = vunpack.c.l.b16 %v1816
    %v1862 = vunpack.c.h.b16 %v1816
    %v1863 = vunpack.c.l.b16 %v1817
    %v1864 = vunpack.c.h.b16 %v1817
    %v1865 = vunpack.c.l.b16 %v1818
    %v1866 = vunpack.c.h.b16 %v1818
    %v1867 = vunpack.c.l.b16 %v1819
    %v1868 = vunpack.c.h.b16 %v1819
    %v1869 = vunpack.c.l.b16 %v1820
    %v1870 = vunpack.c.h.b16 %v1820
    %v1871 = vunpack.c.l.b16 %v1821
    %v1872 = vunpack.c.h.b16 %v1821
    %v1873 = vunpack.c.l.b16 %v1822
    %v1874 = vunpack.c.h.b16 %v1822
    %v1875 = vunpack.c.l.b16 %v1823
    %v1876 = vunpack.c.h.b16 %v1823
    %v1877 = vunpack.c.l.b16 %v1824
    %v1878 = vunpack.c.h.b16 %v1824
    %v1879 = vunpack.c.l.b16 %v1825
    %v1880 = vunpack.c.h.b16 %v1825
    %v1881 = vunpack.c.l.b16 %v1826
    %v1882 = vunpack.c.h.b16 %v1826
    %v1883 = vunpack.c.l.b16 %v1827
    %v1884 = vunpack.c.h.b16 %v1827
    %v1885 = vunpack.c.l.b16 %v1828
    %v1886 = vunpack.c.h.b16 %v1828
    %v1887 = vunpack.c.l.b16 %v1829
    %v1888 = vunpack.c.h.b16 %v1829
    %v1889 = vunpack.c.l.b16 %v1830
    %v1890 = vunpack.c.h.b16 %v1830
    %v1891 = vpack.c.b16 %v1861, %v1859
    %v1892 = vpack.c.b16 %v1862, %v1860
    %v1893 = vpack.c.b16 %v1865, %v1863
    %v1894 = vpack.c.b16 %v1866, %v1864
    %v1895 = vpack.c.b16 %v1869, %v1867
    %v1896 = vpack.c.b16 %v1870, %v1868
    %v1897 = vpack.c.b16 %v1873, %v1871
    %v1898 = vpack.c.b16 %v1874, %v1872
    %v1899 = vpack.c.b16 %v1877, %v1875
    %v1900 = vpack.c.b16 %v1878, %v1876
    %v1901 = vpack.c.b16 %v1881, %v1879
    %v1902 = vpack.c.b16 %v1882, %v1880
    %v1903 = vpack.c.b16 %v1885, %v1883
    %v1904 = vpack.c.b16 %v1886, %v1884
    %v1905 = vpack.c.b16 %v1889, %v1887
    %v1906 = vpack.c.b16 %v1890, %v1888
    %1923 = vmatprep.subr.bf16.mxu0 %v1892
    %1924 = vmatpush1.bf16.msra.mxu0 %v1891
    %1925 = vmatprep.subr.bf16.mxu0 %v1894
    %1926 = vmatpush1.bf16.msra.mxu0 %v1893
    %1927 = vmatprep.subr.bf16.mxu0 %v1896
    %1928 = vmatpush1.bf16.msra.mxu0 %v1895
    %1929 = vmatprep.subr.bf16.mxu0 %v1898
    %1930 = vmatpush1.bf16.msra.mxu0 %v1897
    %1931 = vmatprep.subr.bf16.mxu0 %v1900
    %1932 = vmatpush1.bf16.msra.mxu0 %v1899
    %1933 = vmatprep.subr.bf16.mxu0 %v1902
    %1934 = vmatpush1.bf16.msra.mxu0 %v1901
    %1935 = vmatprep.subr.bf16.mxu0 %v1904
    %1936 = vmatpush1.bf16.msra.mxu0 %v1903
    %1937 = vmatprep.subr.bf16.mxu0 %v1906
    %1938 = vmatpush1.bf16.msra.mxu0 %v1905
    %1939 = vmatprep.subr.bf16.mxu0 0
    %1940 = vmatpush1.bf16.msra.mxu0 0
    %1941 = vmatprep.subr.bf16.mxu0 0
    %1942 = vmatpush1.bf16.msra.mxu0 0
    %1943 = vmatprep.subr.bf16.mxu0 0
    %1944 = vmatpush1.bf16.msra.mxu0 0
    %1945 = vmatprep.subr.bf16.mxu0 0
    %1946 = vmatpush1.bf16.msra.mxu0 0
    %1947 = vmatprep.subr.bf16.mxu0 0
    %1948 = vmatpush1.bf16.msra.mxu0 0
    %1949 = vmatprep.subr.bf16.mxu0 0
    %1950 = vmatpush1.bf16.msra.mxu0 0
    %1951 = vmatprep.subr.bf16.mxu0 0
    %1952 = vmatpush1.bf16.msra.mxu0 0
    %1953 = vmatprep.subr.bf16.mxu0 0
    %1954 = vmatpush1.bf16.msra.mxu0 0
    %1955 = vmatprep.mubr.bf16.mxu0 0
    %1956 = vmatmul.mubr.bf16.gmra.mrb[0].mxu0 %v1810
    %v1957 = vpop.f32.mrb[0].mxu0
    %v1958 = vadd.f32 %v1836, %v1957
    %v1959 = vpop.f32.mrb[0].mxu0
    %v1960 = vadd.f32 %v1840, %v1959
    %v1961 = vpop.f32.mrb[0].mxu0
    %v1962 = vadd.f32 %v1836, %v1961
    %v1963 = vpop.f32.mrb[0].mxu0
    %v1964 = vadd.f32 %v1840, %v1963
    %1965 = vmatprep.mubr.bf16.mxu0 0
    %1966 = vmatmul.mubr.bf16.gmra.mrb[0].mxu0 %v1811
    %v1967 = vpop.f32.mrb[0].mxu0
    %v1968 = vadd.f32 %v1836, %v1967
    %v1969 = vpop.f32.mrb[0].mxu0
    %v1970 = vadd.f32 %v1840, %v1969
    %v1971 = vpop.f32.mrb[0].mxu0
    %v1972 = vadd.f32 %v1836, %v1971
    %v1973 = vpop.f32.mrb[0].mxu0
    %v1974 = vadd.f32 %v1840, %v1973
    %1975 = vmatprep.mubr.bf16.mxu0 0
    %1976 = vmatmul.mubr.bf16.gmra.mrb[0].mxu0 %v1812
    %v1977 = vpop.f32.mrb[0].mxu0
    %v1978 = vadd.f32 %v1836, %v1977
    %v1979 = vpop.f32.mrb[0].mxu0
    %v1980 = vadd.f32 %v1840, %v1979
    %v1981 = vpop.f32.mrb[0].mxu0
    %v1982 = vadd.f32 %v1836, %v1981
    %v1983 = vpop.f32.mrb[0].mxu0
    %v1984 = vadd.f32 %v1840, %v1983
    %1985 = vdwg.mxu0
    %v1986 = vmax.f32 %v1958, 0.0
    %v1987 = vmax.f32 %v1960, 0.0
    %v1988 = vmax.f32 %v1962, 0.0
    %v1989 = vmax.f32 %v1964, 0.0
    %v1990 = vmax.f32 %v1968, 0.0
    %v1991 = vmax.f32 %v1970, 0.0
    %v1992 = vmax.f32 %v1972, 0.0
    %v1993 = vmax.f32 %v1974, 0.0
    %v1994 = vmax.f32 %v1978, 0.0
    %v1995 = vmax.f32 %v1980, 0.0
    %v1996 = vmax.f32 %v1982, 0.0
    %v1997 = vmax.f32 %v1984, 0.0
    %v1998 = vadd.f32 %v1986, %v1988
    %vm1999 = vcmask 1041408
    %v2000 = vsel %vm1999, %v1990, 0.0
    %v2001 = vadd.f32 %v1998, %v2000
    %v2002 = vrot.slane %v2001, 4
    %v2003 = vadd.f32 %v2001, %v2002
    %v2004 = vrot.slane %v2003, 2
    %v2005 = vadd.f32 %v2003, %v2004
    %v2006 = vrot.slane %v2005, 1
    %v2007 = vadd.f32 %v2005, %v2006
    %v2008 = vadd.f32 %v1987, %v1989
    %v2009 = vsel %vm1999, %v1991, 0.0
    %v2010 = vadd.f32 %v2008, %v2009
    %v2011 = vrot.slane %v2010, 4
    %v2012 = vadd.f32 %v2010, %v2011
    %v2013 = vrot.slane %v2012, 2
    %v2014 = vadd.f32 %v2012, %v2013
    %v2015 = vrot.slane %v2014, 1
    %v2016 = vadd.f32 %v2014, %v2015
    %v2017 = vrcp.pop 18.0
    %v2018 = vmul.f32 %v2007, %v2017
    %v2019 = vmul.f32 %v2016, %v2017
    %v2020 = vsub.f32 %v1986, %v2018
    %v2021 = vsub.f32 %v1987, %v2019
    %v2022 = vsub.f32 %v1988, %v2018
    %v2023 = vsub.f32 %v1989, %v2019
    %v2024 = vsub.f32 %v1990, %v2018
    %v2025 = vsub.f32 %v1991, %v2019
    %v2026 = vmul.f32 %v2020, %v2020
    %v2027 = vmul.f32 %v2021, %v2021
    %v2028 = vmul.f32 %v2022, %v2022
    %v2029 = vmul.f32 %v2023, %v2023
    %v2030 = vmul.f32 %v2024, %v2024
    %v2031 = vmul.f32 %v2025, %v2025
    %v2032 = vadd.f32 %v2026, %v2028
    %v2033 = vsel %vm1999, %v2030, 0.0
    %v2034 = vadd.f32 %v2032, %v2033
    %v2035 = vrot.slane %v2034, 4
    %v2036 = vadd.f32 %v2034, %v2035
    %v2037 = vrot.slane %v2036, 2
    %v2038 = vadd.f32 %v2036, %v2037
    %v2039 = vrot.slane %v2038, 1
    %v2040 = vadd.f32 %v2038, %v2039
    %v2041 = vadd.f32 %v2027, %v2029
    %v2042 = vsel %vm1999, %v2031, 0.0
    %v2043 = vadd.f32 %v2041, %v2042
    %v2044 = vrot.slane %v2043, 4
    %v2045 = vadd.f32 %v2043, %v2044
    %v2046 = vrot.slane %v2045, 2
    %v2047 = vadd.f32 %v2045, %v2046
    %v2048 = vrot.slane %v2047, 1
    %v2049 = vadd.f32 %v2047, %v2048
    %v2050 = vrcp.pop 17.0
    %v2051 = vmul.f32 %v2040, %v2050
    %v2052 = vmul.f32 %v2049, %v2050
    %v2053 = vrsqrt.pop %v2051
    %v2054 = vmul.f32 %v2051, %v2053
    %vm2055 = vcmp.eq.f32.partialorder %v2051, inf
    %v2056 = vsel %vm2055, %v2051, %v2054
    %vm2057 = vcmp.eq.f32.partialorder %v2051, 0.0
    %v2058 = vand.u32 %v2051, 2147483648
    %v2059 = vsel %vm2057, %v2058, %v2056
    %v2060 = vrsqrt.pop %v2052
    %v2061 = vmul.f32 %v2052, %v2060
    %vm2062 = vcmp.eq.f32.partialorder %v2052, inf
    %v2063 = vsel %vm2062, %v2052, %v2061
    %vm2064 = vcmp.eq.f32.partialorder %v2052, 0.0
    %v2065 = vand.u32 %v2052, 2147483648
    %v2066 = vsel %vm2064, %v2065, %v2063
    %v2067 = vadd.f32 %v1992, %v1994
    %v2068 = vsel %vm1999, %v1996, 0.0
    %v2069 = vadd.f32 %v2067, %v2068
    %v2070 = vrot.slane %v2069, 4
    %v2071 = vadd.f32 %v2069, %v2070
    %v2072 = vrot.slane %v2071, 2
    %v2073 = vadd.f32 %v2071, %v2072
    %v2074 = vrot.slane %v2073, 1
    %v2075 = vadd.f32 %v2073, %v2074
    %v2076 = vadd.f32 %v1993, %v1995
    %v2077 = vsel %vm1999, %v1997, 0.0
    %v2078 = vadd.f32 %v2076, %v2077
    %v2079 = vrot.slane %v2078, 4
    %v2080 = vadd.f32 %v2078, %v2079
    %v2081 = vrot.slane %v2080, 2
    %v2082 = vadd.f32 %v2080, %v2081
    %v2083 = vrot.slane %v2082, 1
    %v2084 = vadd.f32 %v2082, %v2083
    %v2085 = vmul.f32 %v2075, %v2017
    %v2086 = vmul.f32 %v2084, %v2017
    %v2087 = vsub.f32 %v1992, %v2085
    %v2088 = vsub.f32 %v1993, %v2086
    %v2089 = vsub.f32 %v1994, %v2085
    %v2090 = vsub.f32 %v1995, %v2086
    %v2091 = vsub.f32 %v1996, %v2085
    %v2092 = vsub.f32 %v1997, %v2086
    %v2093 = vmul.f32 %v2087, %v2087
    %v2094 = vmul.f32 %v2088, %v2088
    %v2095 = vmul.f32 %v2089, %v2089
    %v2096 = vmul.f32 %v2090, %v2090
    %v2097 = vmul.f32 %v2091, %v2091
    %v2098 = vmul.f32 %v2092, %v2092
    %v2099 = vadd.f32 %v2093, %v2095
    %v2100 = vsel %vm1999, %v2097, 0.0
    %v2101 = vadd.f32 %v2099, %v2100
    %v2102 = vrot.slane %v2101, 4
    %v2103 = vadd.f32 %v2101, %v2102
    %v2104 = vrot.slane %v2103, 2
    %v2105 = vadd.f32 %v2103, %v2104
    %v2106 = vrot.slane %v2105, 1
    %v2107 = vadd.f32 %v2105, %v2106
    %v2108 = vadd.f32 %v2094, %v2096
    %v2109 = vsel %vm1999, %v2098, 0.0
    %v2110 = vadd.f32 %v2108, %v2109
    %v2111 = vrot.slane %v2110, 4
    %v2112 = vadd.f32 %v2110, %v2111
    %v2113 = vrot.slane %v2112, 2
    %v2114 = vadd.f32 %v2112, %v2113
    %v2115 = vrot.slane %v2114, 1
    %v2116 = vadd.f32 %v2114, %v2115
    %v2117 = vmul.f32 %v2107, %v2050
    %v2118 = vmul.f32 %v2116, %v2050
    %v2119 = vrsqrt.pop %v2117
    %v2120 = vmul.f32 %v2117, %v2119
    %vm2121 = vcmp.eq.f32.partialorder %v2117, inf
    %v2122 = vsel %vm2121, %v2117, %v2120
    %vm2123 = vcmp.eq.f32.partialorder %v2117, 0.0
    %v2124 = vand.u32 %v2117, 2147483648
    %v2125 = vsel %vm2123, %v2124, %v2122
    %v2126 = vrsqrt.pop %v2118
    %v2127 = vmul.f32 %v2118, %v2126
    %vm2128 = vcmp.eq.f32.partialorder %v2118, inf
    %v2129 = vsel %vm2128, %v2118, %v2127
    %vm2130 = vcmp.eq.f32.partialorder %v2118, 0.0
    %v2131 = vand.u32 %v2118, 2147483648
    %v2132 = vsel %vm2130, %v2131, %v2129
    %v2137 = vrot.slane %v2085, 7
    %v2138 = vrot.slane %v2086, 7
    %v2139 = vrot.slane %v2125, 7
    %v2140 = vrot.slane %v2132, 7
    %vm2145 = vcmask 1040384
    %v2146 = vsel %vm2145, %v2018, %v2137
    %v2147 = vsel %vm2145, %v2019, %v2138
    %v2148 = vsel %vm2145, %v2059, %v2139
    %v2149 = vsel %vm2145, %v2066, %v2140
    %v2150 = vpack.c.bf16 %v2146, %v2146
    %v2151 = vpack.c.bf16 %v2147, %v2147
    %v2152 = vpack.c.bf16 %v2148, %v2148
    %v2153 = vpack.c.bf16 %v2149, %v2149
    %v2154 = vld [vmem:[#allocation7] sm:$0xf]
    %v2155 = vld [vmem:[#allocation7 + $0x4] sm:$0xf]
    %v2156 = vld [vmem:[#allocation7 + $0x8] sm:$0xf]
    %v2157 = vld [vmem:[#allocation7 + $0xc] sm:$0xf]
    %v2158 = vld [vmem:[#allocation7 + $0x10] sm:$0xf]
    %v2159 = vld [vmem:[#allocation7 + $0x14] sm:$0xf]
    %v2160 = vld [vmem:[#allocation7 + $0x18] sm:$0xf]
    %v2161 = vld [vmem:[#allocation7 + $0x1c] sm:$0xf]
    %v2162 = vld [vmem:[#allocation7 + $0x20] sm:$0xf]
    %v2163 = vld [vmem:[#allocation7 + $0x24] sm:$0xf]
    %v2164 = vld [vmem:[#allocation7 + $0x28] sm:$0xf]
    %v2165 = vld [vmem:[#allocation7 + $0x2c] sm:$0xf]
    %v2166 = vld [vmem:[#allocation7 + $0x30] sm:$0xf]
    %v2167 = vld [vmem:[#allocation7 + $0x34] sm:$0xf]
    %v2168 = vld [vmem:[#allocation7 + $0x38] sm:$0xf]
    %v2169 = vld [vmem:[#allocation7 + $0x3c] sm:$0xf]
    %v2170 = vld [vmem:[#allocation7 + $0x40] sm:$0xf]
    %v2171 = vld [vmem:[#allocation7 + $0x44] sm:$0xf]
    %v2172 = vld [vmem:[#allocation7 + $0x48] sm:$0xf]
    %v2173 = vld [vmem:[#allocation7 + $0x4c] sm:$0xf]
    %v2174 = vld [vmem:[#allocation7 + $0x50] sm:$0xf]
    %v2175 = vld [vmem:[#allocation7 + $0x54] sm:$0xf]
    %v2176 = vld [vmem:[#allocation7 + $0x58] sm:$0xf]
    %v2177 = vld [vmem:[#allocation7 + $0x5c] sm:$0xf]
    %v2178 = vld [vmem:[#allocation7 + $0x60] sm:$0xf]
    %v2179 = vld [vmem:[#allocation7 + $0x64] sm:$0xf]
    %v2180 = vld [vmem:[#allocation7 + $0x68] sm:$0xf]
    %v2181 = vld [vmem:[#allocation7 + $0x6c] sm:$0xf]
    %v2182 = vld [vmem:[#allocation7 + $0x70] sm:$0xf]
    %v2183 = vld [vmem:[#allocation7 + $0x74] sm:$0xf]
    %v2184 = vld [vmem:[#allocation7 + $0x78] sm:$0xf]
    %v2185 = vld [vmem:[#allocation7 + $0x7c] sm:$0xf]
    %v2186 = vld [vmem:[#allocation7 + $0x80] sm:$0xf]
    %v2187 = vld [vmem:[#allocation7 + $0x84] sm:$0xf]
    %v2188 = vld [vmem:[#allocation7 + $0x88] sm:$0xf]
    %v2189 = vld [vmem:[#allocation7 + $0x8c] sm:$0xf]
    %v2190 = vld [vmem:[#allocation7 + $0x90] sm:$0xf]
    %v2191 = vld [vmem:[#allocation7 + $0x94] sm:$0xf]
    %v2192 = vld [vmem:[#allocation7 + $0x98] sm:$0xf]
    %v2193 = vld [vmem:[#allocation7 + $0x9c] sm:$0xf]
    %v2194 = vld [vmem:[#allocation7 + $0xa0] sm:$0xf]
    %v2195 = vld [vmem:[#allocation7 + $0xa4] sm:$0xf]
    %v2196 = vld [vmem:[#allocation7 + $0xa8] sm:$0xf]
    %v2197 = vld [vmem:[#allocation7 + $0xac] sm:$0xf]
    %v2198 = vld [vmem:[#allocation7 + $0xb0] sm:$0xf]
    %v2199 = vld [vmem:[#allocation7 + $0xb4] sm:$0xf]
    %v2200 = vld [vmem:[#allocation7 + $0xb8] sm:$0xf]
    %v2201 = vld [vmem:[#allocation7 + $0xbc] sm:$0xf]
    %v2202 = vld [vmem:[#allocation7 + $0xc0] sm:$0xf]
    %v2203 = vld [vmem:[#allocation7 + $0xc4] sm:$0xf]
    %v2204 = vld [vmem:[#allocation7 + $0xc8] sm:$0xf]
    %v2205 = vld [vmem:[#allocation7 + $0xcc] sm:$0xf]
    %v2206 = vld [vmem:[#allocation7 + $0xd0] sm:$0xf]
    %v2207 = vld [vmem:[#allocation7 + $0xd4] sm:$0xf]
    %v2208 = vld [vmem:[#allocation7 + $0xd8] sm:$0xf]
    %v2209 = vld [vmem:[#allocation7 + $0xdc] sm:$0xf]
    %v2210 = vld [vmem:[#allocation7 + $0xe0] sm:$0xf]
    %v2211 = vld [vmem:[#allocation7 + $0xe4] sm:$0xf]
    %v2212 = vld [vmem:[#allocation7 + $0xe8] sm:$0xf]
    %v2213 = vld [vmem:[#allocation7 + $0xec] sm:$0xf]
    %v2214 = vld [vmem:[#allocation7 + $0xf0] sm:$0xf]
    %v2215 = vld [vmem:[#allocation7 + $0xf4] sm:$0xf]
    %v2216 = vld [vmem:[#allocation7 + $0xf8] sm:$0xf]
    %v2217 = vld [vmem:[#allocation7 + $0xfc] sm:$0xf]
    %v2218 = vld [vmem:[%s12] sm:$0x1]
    %v2220 = vlaneseq
    %v2221 = vshrl.u32 %v2220, 7
    %v2222 = vsub.s32 0, %v2221
    %v2223 = vrot.slane %v2218, %v2222
    %v2289 = vunpack.c.l.b16 %v2154
    %v2290 = vunpack.c.l.b16 %v2155
    %v2291 = vunpack.c.l.b16 %v2156
    %v2292 = vunpack.c.l.b16 %v2157
    %v2293 = vunpack.c.l.b16 %v2158
    %v2294 = vunpack.c.l.b16 %v2159
    %v2295 = vunpack.c.l.b16 %v2160
    %v2296 = vunpack.c.l.b16 %v2161
    %v2297 = vunpack.c.l.b16 %v2162
    %v2298 = vunpack.c.l.b16 %v2163
    %v2299 = vunpack.c.l.b16 %v2164
    %v2300 = vunpack.c.l.b16 %v2165
    %v2301 = vunpack.c.l.b16 %v2166
    %v2302 = vunpack.c.l.b16 %v2167
    %v2303 = vunpack.c.l.b16 %v2168
    %v2304 = vunpack.c.l.b16 %v2169
    %v2305 = vunpack.c.l.b16 %v2170
    %v2306 = vunpack.c.l.b16 %v2171
    %v2307 = vunpack.c.l.b16 %v2172
    %v2308 = vunpack.c.l.b16 %v2173
    %v2309 = vunpack.c.l.b16 %v2174
    %v2310 = vunpack.c.l.b16 %v2175
    %v2311 = vunpack.c.l.b16 %v2176
    %v2312 = vunpack.c.l.b16 %v2177
    %v2313 = vunpack.c.l.b16 %v2178
    %v2314 = vunpack.c.l.b16 %v2179
    %v2315 = vunpack.c.l.b16 %v2180
    %v2316 = vunpack.c.l.b16 %v2181
    %v2317 = vunpack.c.l.b16 %v2182
    %v2318 = vunpack.c.l.b16 %v2183
    %v2319 = vunpack.c.l.b16 %v2184
    %v2320 = vunpack.c.l.b16 %v2185
    %v2321 = vunpack.c.l.b16 %v2186
    %v2322 = vunpack.c.l.b16 %v2187
    %v2323 = vunpack.c.l.b16 %v2188
    %v2324 = vunpack.c.l.b16 %v2189
    %v2325 = vunpack.c.l.b16 %v2190
    %v2326 = vunpack.c.l.b16 %v2191
    %v2327 = vunpack.c.l.b16 %v2192
    %v2328 = vunpack.c.l.b16 %v2193
    %v2329 = vunpack.c.l.b16 %v2194
    %v2330 = vunpack.c.l.b16 %v2195
    %v2331 = vunpack.c.l.b16 %v2196
    %v2332 = vunpack.c.l.b16 %v2197
    %v2333 = vunpack.c.l.b16 %v2198
    %v2334 = vunpack.c.l.b16 %v2199
    %v2335 = vunpack.c.l.b16 %v2200
    %v2336 = vunpack.c.l.b16 %v2201
    %v2337 = vunpack.c.l.b16 %v2202
    %v2338 = vunpack.c.l.b16 %v2203
    %v2339 = vunpack.c.l.b16 %v2204
    %v2340 = vunpack.c.l.b16 %v2205
    %v2341 = vunpack.c.l.b16 %v2206
    %v2342 = vunpack.c.l.b16 %v2207
    %v2343 = vunpack.c.l.b16 %v2208
    %v2344 = vunpack.c.l.b16 %v2209
    %v2345 = vunpack.c.l.b16 %v2210
    %v2346 = vunpack.c.l.b16 %v2211
    %v2347 = vunpack.c.l.b16 %v2212
    %v2348 = vunpack.c.l.b16 %v2213
    %v2349 = vunpack.c.l.b16 %v2214
    %v2350 = vunpack.c.l.b16 %v2215
    %v2351 = vunpack.c.l.b16 %v2216
    %v2352 = vunpack.c.l.b16 %v2217
    %v2353 = vpack.c.b16 %v2290, %v2289
    %v2354 = vpack.c.b16 %v2292, %v2291
    %v2355 = vpack.c.b16 %v2294, %v2293
    %v2356 = vpack.c.b16 %v2296, %v2295
    %v2357 = vpack.c.b16 %v2298, %v2297
    %v2358 = vpack.c.b16 %v2300, %v2299
    %v2359 = vpack.c.b16 %v2302, %v2301
    %v2360 = vpack.c.b16 %v2304, %v2303
    %v2361 = vpack.c.b16 %v2306, %v2305
    %v2362 = vpack.c.b16 %v2308, %v2307
    %v2363 = vpack.c.b16 %v2310, %v2309
    %v2364 = vpack.c.b16 %v2312, %v2311
    %v2365 = vpack.c.b16 %v2314, %v2313
    %v2366 = vpack.c.b16 %v2316, %v2315
    %v2367 = vpack.c.b16 %v2318, %v2317
    %v2368 = vpack.c.b16 %v2320, %v2319
    %v2369 = vpack.c.b16 %v2322, %v2321
    %v2370 = vpack.c.b16 %v2324, %v2323
    %v2371 = vpack.c.b16 %v2326, %v2325
    %v2372 = vpack.c.b16 %v2328, %v2327
    %v2373 = vpack.c.b16 %v2330, %v2329
    %v2374 = vpack.c.b16 %v2332, %v2331
    %v2375 = vpack.c.b16 %v2334, %v2333
    %v2376 = vpack.c.b16 %v2336, %v2335
    %v2377 = vpack.c.b16 %v2338, %v2337
    %v2378 = vpack.c.b16 %v2340, %v2339
    %v2379 = vpack.c.b16 %v2342, %v2341
    %v2380 = vpack.c.b16 %v2344, %v2343
    %v2381 = vpack.c.b16 %v2346, %v2345
    %v2382 = vpack.c.b16 %v2348, %v2347
    %v2383 = vpack.c.b16 %v2350, %v2349
    %v2384 = vpack.c.b16 %v2352, %v2351
    %2417 = vmatprep.subr.bf16.mxu0 0
    %2418 = vmatpush1.bf16.msra.mxu0 %v2353
    %2419 = vmatprep.subr.bf16.mxu0 0
    %2420 = vmatpush1.bf16.msra.mxu0 %v2354
    %2421 = vmatprep.subr.bf16.mxu0 0
    %2422 = vmatpush1.bf16.msra.mxu0 %v2355
    %2423 = vmatprep.subr.bf16.mxu0 0
    %2424 = vmatpush1.bf16.msra.mxu0 %v2356
    %2425 = vmatprep.subr.bf16.mxu0 0
    %2426 = vmatpush1.bf16.msra.mxu0 %v2357
    %2427 = vmatprep.subr.bf16.mxu0 0
    %2428 = vmatpush1.bf16.msra.mxu0 %v2358
    %2429 = vmatprep.subr.bf16.mxu0 0
    %2430 = vmatpush1.bf16.msra.mxu0 %v2359
    %2431 = vmatprep.subr.bf16.mxu0 0
    %2432 = vmatpush1.bf16.msra.mxu0 %v2360
    %2433 = vmatprep.subr.bf16.mxu0 0
    %2434 = vmatpush1.bf16.msra.mxu0 %v2361
    %2435 = vmatprep.subr.bf16.mxu0 0
    %2436 = vmatpush1.bf16.msra.mxu0 %v2362
    %2437 = vmatprep.subr.bf16.mxu0 0
    %2438 = vmatpush1.bf16.msra.mxu0 %v2363
    %2439 = vmatprep.subr.bf16.mxu0 0
    %2440 = vmatpush1.bf16.msra.mxu0 %v2364
    %2441 = vmatprep.subr.bf16.mxu0 0
    %2442 = vmatpush1.bf16.msra.mxu0 %v2365
    %2443 = vmatprep.subr.bf16.mxu0 0
    %2444 = vmatpush1.bf16.msra.mxu0 %v2366
    %2445 = vmatprep.subr.bf16.mxu0 0
    %2446 = vmatpush1.bf16.msra.mxu0 %v2367
    %2447 = vmatprep.subr.bf16.mxu0 0
    %2448 = vmatpush1.bf16.msra.mxu0 %v2368
    %2449 = vmatprep.mubr.bf16.mxu0 %v2151
    %2450 = vmatmul.mubr.bf16.gmra.mrb[0].mxu0 %v2150
    %v2451 = vpop.f32.mrb[0].mxu0
    %v2452 = vadd.f32 %v2223, %v2451
    %v2453 = vpop.f32.mrb[0].mxu0
    %v2454 = vpop.f32.mrb[0].mxu0
    %v2455 = vpop.f32.mrb[0].mxu0
    %2456 = vdwg.mxu0
    %2457 = vmatprep.subr.bf16.mxu0 0
    %2458 = vmatpush1.bf16.msra.mxu0 %v2369
    %2459 = vmatprep.subr.bf16.mxu0 0
    %2460 = vmatpush1.bf16.msra.mxu0 %v2370
    %2461 = vmatprep.subr.bf16.mxu0 0
    %2462 = vmatpush1.bf16.msra.mxu0 %v2371
    %2463 = vmatprep.subr.bf16.mxu0 0
    %2464 = vmatpush1.bf16.msra.mxu0 %v2372
    %2465 = vmatprep.subr.bf16.mxu0 0
    %2466 = vmatpush1.bf16.msra.mxu0 %v2373
    %2467 = vmatprep.subr.bf16.mxu0 0
    %2468 = vmatpush1.bf16.msra.mxu0 %v2374
    %2469 = vmatprep.subr.bf16.mxu0 0
    %2470 = vmatpush1.bf16.msra.mxu0 %v2375
    %2471 = vmatprep.subr.bf16.mxu0 0
    %2472 = vmatpush1.bf16.msra.mxu0 %v2376
    %2473 = vmatprep.subr.bf16.mxu0 0
    %2474 = vmatpush1.bf16.msra.mxu0 %v2377
    %2475 = vmatprep.subr.bf16.mxu0 0
    %2476 = vmatpush1.bf16.msra.mxu0 %v2378
    %2477 = vmatprep.subr.bf16.mxu0 0
    %2478 = vmatpush1.bf16.msra.mxu0 %v2379
    %2479 = vmatprep.subr.bf16.mxu0 0
    %2480 = vmatpush1.bf16.msra.mxu0 %v2380
    %2481 = vmatprep.subr.bf16.mxu0 0
    %2482 = vmatpush1.bf16.msra.mxu0 %v2381
    %2483 = vmatprep.subr.bf16.mxu0 0
    %2484 = vmatpush1.bf16.msra.mxu0 %v2382
    %2485 = vmatprep.subr.bf16.mxu0 0
    %2486 = vmatpush1.bf16.msra.mxu0 %v2383
    %2487 = vmatprep.subr.bf16.mxu0 0
    %2488 = vmatpush1.bf16.msra.mxu0 %v2384
    %2489 = vmatprep.mubr.bf16.mxu0 %v2153
    %2490 = vmatmul.mubr.bf16.gmra.mrb[0].mxu0 %v2152
    %v2491 = vpop.f32.mrb[0].mxu0
    %v2492 = vadd.f32 %v2452, %v2491
    %v2493 = vpop.f32.mrb[0].mxu0
    %v2494 = vpop.f32.mrb[0].mxu0
    %v2495 = vpop.f32.mrb[0].mxu0
    %2496 = vdwg.mxu0
    %v2497 = vmax.f32 %v2492, 0.0
    %2498 = vst [vmem:[#allocation11] sm:$0x3] %v2497
    %v2499 = vpack.c.bf16 %v2497, %v2497
    %v2500 = vld [vmem:[#allocation8] sm:$0xf]
    %v2501 = vld [vmem:[#allocation8 + $0x4] sm:$0xf]
    %v2502 = vld [vmem:[#allocation8 + $0x8] sm:$0xf]
    %v2503 = vld [vmem:[#allocation8 + $0xc] sm:$0xf]
    %v2504 = vld [vmem:[#allocation8 + $0x10] sm:$0xf]
    %v2505 = vld [vmem:[#allocation8 + $0x14] sm:$0xf]
    %v2506 = vld [vmem:[#allocation8 + $0x18] sm:$0xf]
    %v2507 = vld [vmem:[#allocation8 + $0x1c] sm:$0xf]
    %v2508 = vld [vmem:[#allocation8 + $0x20] sm:$0xf]
    %v2509 = vld [vmem:[#allocation8 + $0x24] sm:$0xf]
    %v2510 = vld [vmem:[#allocation8 + $0x28] sm:$0xf]
    %v2511 = vld [vmem:[#allocation8 + $0x2c] sm:$0xf]
    %v2512 = vld [vmem:[#allocation8 + $0x30] sm:$0xf]
    %v2513 = vld [vmem:[#allocation8 + $0x34] sm:$0xf]
    %v2514 = vld [vmem:[#allocation8 + $0x38] sm:$0xf]
    %v2515 = vld [vmem:[#allocation8 + $0x3c] sm:$0xf]
    %v2516 = vld [vmem:[%s14] sm:$0x1]
    %v2518 = vlaneseq
    %v2519 = vshrl.u32 %v2518, 7
    %v2520 = vsub.s32 0, %v2519
    %v2521 = vrot.slane %v2516, %v2520
    %v2539 = vunpack.c.l.b16 %v2500
    %v2540 = vunpack.c.l.b16 %v2501
    %v2541 = vunpack.c.l.b16 %v2502
    %v2542 = vunpack.c.l.b16 %v2503
    %v2543 = vunpack.c.l.b16 %v2504
    %v2544 = vunpack.c.l.b16 %v2505
    %v2545 = vunpack.c.l.b16 %v2506
    %v2546 = vunpack.c.l.b16 %v2507
    %v2547 = vunpack.c.l.b16 %v2508
    %v2548 = vunpack.c.l.b16 %v2509
    %v2549 = vunpack.c.l.b16 %v2510
    %v2550 = vunpack.c.l.b16 %v2511
    %v2551 = vunpack.c.l.b16 %v2512
    %v2552 = vunpack.c.l.b16 %v2513
    %v2553 = vunpack.c.l.b16 %v2514
    %v2554 = vunpack.c.l.b16 %v2515
    %v2555 = vpack.c.b16 %v2540, %v2539
    %v2556 = vpack.c.b16 %v2542, %v2541
    %v2557 = vpack.c.b16 %v2544, %v2543
    %v2558 = vpack.c.b16 %v2546, %v2545
    %v2559 = vpack.c.b16 %v2548, %v2547
    %v2560 = vpack.c.b16 %v2550, %v2549
    %v2561 = vpack.c.b16 %v2552, %v2551
    %v2562 = vpack.c.b16 %v2554, %v2553
    %2571 = vmatprep.subr.bf16.mxu0 0
    %2572 = vmatpush1.bf16.msra.mxu0 %v2555
    %2573 = vmatprep.subr.bf16.mxu0 0
    %2574 = vmatpush1.bf16.msra.mxu0 %v2556
    %2575 = vmatprep.subr.bf16.mxu0 0
    %2576 = vmatpush1.bf16.msra.mxu0 %v2557
    %2577 = vmatprep.subr.bf16.mxu0 0
    %2578 = vmatpush1.bf16.msra.mxu0 %v2558
    %2579 = vmatprep.subr.bf16.mxu0 0
    %2580 = vmatpush1.bf16.msra.mxu0 %v2559
    %2581 = vmatprep.subr.bf16.mxu0 0
    %2582 = vmatpush1.bf16.msra.mxu0 %v2560
    %2583 = vmatprep.subr.bf16.mxu0 0
    %2584 = vmatpush1.bf16.msra.mxu0 %v2561
    %2585 = vmatprep.subr.bf16.mxu0 0
    %2586 = vmatpush1.bf16.msra.mxu0 %v2562
    %2587 = vmatprep.subr.bf16.mxu0 0
    %2588 = vmatpush1.bf16.msra.mxu0 0
    %2589 = vmatprep.subr.bf16.mxu0 0
    %2590 = vmatpush1.bf16.msra.mxu0 0
    %2591 = vmatprep.subr.bf16.mxu0 0
    %2592 = vmatpush1.bf16.msra.mxu0 0
    %2593 = vmatprep.subr.bf16.mxu0 0
    %2594 = vmatpush1.bf16.msra.mxu0 0
    %2595 = vmatprep.subr.bf16.mxu0 0
    %2596 = vmatpush1.bf16.msra.mxu0 0
    %2597 = vmatprep.subr.bf16.mxu0 0
    %2598 = vmatpush1.bf16.msra.mxu0 0
    %2599 = vmatprep.subr.bf16.mxu0 0
    %2600 = vmatpush1.bf16.msra.mxu0 0
    %2601 = vmatprep.subr.bf16.mxu0 0
    %2602 = vmatpush1.bf16.msra.mxu0 0
    %2603 = vmatprep.mubr.bf16.mxu0 0
    %2604 = vmatmul.mubr.bf16.gmra.mrb[0].mxu0 %v2499
    %v2605 = vpop.f32.mrb[0].mxu0
    %v2606 = vadd.f32 %v2521, %v2605
    %v2607 = vpop.f32.mrb[0].mxu0
    %v2608 = vpop.f32.mrb[0].mxu0
    %v2609 = vpop.f32.mrb[0].mxu0
    %2610 = vdwg.mxu0
    %v2611 = vmax.f32 %v2606, 0.0
    %v2612 = vpack.c.bf16 %v2611, %v2611
    %v2613 = vld [vmem:[#allocation10] sm:$0xf]
    %v2614 = vld [vmem:[#allocation10 + $0x4] sm:$0xf]
    %v2615 = vld [vmem:[#allocation10 + $0x8] sm:$0xf]
    %v2616 = vld [vmem:[#allocation10 + $0xc] sm:$0xf]
    %v2617 = vld [vmem:[#allocation10 + $0x10] sm:$0xf]
    %v2618 = vld [vmem:[#allocation10 + $0x14] sm:$0xf]
    %v2619 = vld [vmem:[#allocation10 + $0x18] sm:$0xf]
    %v2620 = vld [vmem:[#allocation10 + $0x1c] sm:$0xf]
    %v2621 = vld [vmem:[#allocation10 + $0x20] sm:$0xf]
    %v2622 = vld [vmem:[#allocation10 + $0x24] sm:$0xf]
    %v2623 = vld [vmem:[#allocation10 + $0x28] sm:$0xf]
    %v2624 = vld [vmem:[#allocation10 + $0x2c] sm:$0xf]
    %v2625 = vld [vmem:[#allocation10 + $0x30] sm:$0xf]
    %v2626 = vld [vmem:[#allocation10 + $0x34] sm:$0xf]
    %v2627 = vld [vmem:[#allocation10 + $0x38] sm:$0xf]
    %v2628 = vld [vmem:[#allocation10 + $0x3c] sm:$0xf]
    %v2629 = vld [vmem:[%s16] sm:$0x1]
    %v2631 = vlaneseq
    %v2632 = vshrl.u32 %v2631, 7
    %v2633 = vsub.s32 0, %v2632
    %v2634 = vrot.slane %v2629, %v2633
    %v2652 = vunpack.c.l.b16 %v2613
    %v2653 = vunpack.c.l.b16 %v2614
    %v2654 = vunpack.c.l.b16 %v2615
    %v2655 = vunpack.c.l.b16 %v2616
    %v2656 = vunpack.c.l.b16 %v2617
    %v2657 = vunpack.c.l.b16 %v2618
    %v2658 = vunpack.c.l.b16 %v2619
    %v2659 = vunpack.c.l.b16 %v2620
    %v2660 = vunpack.c.l.b16 %v2621
    %v2661 = vunpack.c.l.b16 %v2622
    %v2662 = vunpack.c.l.b16 %v2623
    %v2663 = vunpack.c.l.b16 %v2624
    %v2664 = vunpack.c.l.b16 %v2625
    %v2665 = vunpack.c.l.b16 %v2626
    %v2666 = vunpack.c.l.b16 %v2627
    %v2667 = vunpack.c.l.b16 %v2628
    %v2668 = vpack.c.b16 %v2653, %v2652
    %v2669 = vpack.c.b16 %v2655, %v2654
    %v2670 = vpack.c.b16 %v2657, %v2656
    %v2671 = vpack.c.b16 %v2659, %v2658
    %v2672 = vpack.c.b16 %v2661, %v2660
    %v2673 = vpack.c.b16 %v2663, %v2662
    %v2674 = vpack.c.b16 %v2665, %v2664
    %v2675 = vpack.c.b16 %v2667, %v2666
    %2684 = vmatprep.subr.bf16.mxu0 0
    %2685 = vmatpush1.bf16.msra.mxu0 %v2668
    %2686 = vmatprep.subr.bf16.mxu0 0
    %2687 = vmatpush1.bf16.msra.mxu0 %v2669
    %2688 = vmatprep.subr.bf16.mxu0 0
    %2689 = vmatpush1.bf16.msra.mxu0 %v2670
    %2690 = vmatprep.subr.bf16.mxu0 0
    %2691 = vmatpush1.bf16.msra.mxu0 %v2671
    %2692 = vmatprep.subr.bf16.mxu0 0
    %2693 = vmatpush1.bf16.msra.mxu0 %v2672
    %2694 = vmatprep.subr.bf16.mxu0 0
    %2695 = vmatpush1.bf16.msra.mxu0 %v2673
    %2696 = vmatprep.subr.bf16.mxu0 0
    %2697 = vmatpush1.bf16.msra.mxu0 %v2674
    %2698 = vmatprep.subr.bf16.mxu0 0
    %2699 = vmatpush1.bf16.msra.mxu0 %v2675
    %2700 = vmatprep.subr.bf16.mxu0 0
    %2701 = vmatpush1.bf16.msra.mxu0 0
    %2702 = vmatprep.subr.bf16.mxu0 0
    %2703 = vmatpush1.bf16.msra.mxu0 0
    %2704 = vmatprep.subr.bf16.mxu0 0
    %2705 = vmatpush1.bf16.msra.mxu0 0
    %2706 = vmatprep.subr.bf16.mxu0 0
    %2707 = vmatpush1.bf16.msra.mxu0 0
    %2708 = vmatprep.subr.bf16.mxu0 0
    %2709 = vmatpush1.bf16.msra.mxu0 0
    %2710 = vmatprep.subr.bf16.mxu0 0
    %2711 = vmatpush1.bf16.msra.mxu0 0
    %2712 = vmatprep.subr.bf16.mxu0 0
    %2713 = vmatpush1.bf16.msra.mxu0 0
    %2714 = vmatprep.subr.bf16.mxu0 0
    %2715 = vmatpush1.bf16.msra.mxu0 0
    %2716 = vmatprep.mubr.bf16.mxu0 0
    %2717 = vmatmul.mubr.bf16.gmra.mrb[0].mxu0 %v2612
    %v2718 = vpop.f32.mrb[0].mxu0
    %v2719 = vadd.f32 %v2634, %v2718
    %v2720 = vpop.f32.mrb[0].mxu0
    %v2721 = vpop.f32.mrb[0].mxu0
    %v2722 = vpop.f32.mrb[0].mxu0
    %2723 = vdwg.mxu0
    %vm2724 = vcmask 123904
    %2725 = vst.msk [vmem:[#allocation12] sm:$0x3] %vm2724, %v2719
    // Predicated region
    $region90: #{tdnn_v1_forward.1} parent=1 // pred_check
      _
    $region91: #{tdnn_v1_forward.1} parent=1 // pred_check_branch
      %2727 = sbr.rel (0) target = $region93
    $region92: #{tdnn_v1_forward.1} parent=1 // pred_region
      %s2729 = ssub.s32 32, 32
      %2730 = vsyncadd [#allocation4], %s2729
      %s2732 = sshll.u32 [#allocation11], 4
      %s2733 = int_to_ptr.vmem [resolvable:$true] %s2732
      %2735 = dma.vmem_to_hbm [thread:$0]  %s2733, 32, %s17, [#allocation4]
    $region93: #{tdnn_v1_forward.1} parent=1 // pred_fallthru
      _
    // Predicated region
    $region94: #{tdnn_v1_forward.1} parent=1 // pred_check
      _
    $region95: #{tdnn_v1_forward.1} parent=1 // pred_check_branch
      %2737 = sbr.rel (0) target = $region97
    $region96: #{tdnn_v1_forward.1} parent=1 // pred_region
      %s2739 = ssub.s32 32, 32
      %2740 = vsyncadd [#allocation13], %s2739
      %s2742 = sshll.u32 [#allocation12], 4
      %s2743 = int_to_ptr.vmem [resolvable:$true] %s2742
      %2745 = dma.vmem_to_hbm [thread:$0]  %s2743, 32, %s18, [#allocation13]
    $region97: #{tdnn_v1_forward.1} parent=1 // pred_fallthru
      _
    // Predicated region
    $region98: #{tdnn_v1_forward.1} parent=1 // pred_check
      _
    $region99: #{tdnn_v1_forward.1} parent=1 // pred_check_branch
      %2747 = sbr.rel (0) target = $region101
    $region100: #{tdnn_v1_forward.1} parent=1 // pred_region
      %2748 = dma.done [#allocation4], 32
    $region101: #{tdnn_v1_forward.1} parent=1 // pred_fallthru
      _
    // Predicated region
    $region102: #{tdnn_v1_forward.1} parent=1 // pred_check
      _
    $region103: #{tdnn_v1_forward.1} parent=1 // pred_check_branch
      %2750 = sbr.rel (0) target = $region105
    $region104: #{tdnn_v1_forward.1} parent=1 // pred_region
      %2751 = dma.done [#allocation13], 32
    $region105: #{tdnn_v1_forward.1} parent=1 // pred_fallthru
      _
    %2752 = vsyncpa [#allocation3], 1
    %2753 = vsyncpa [#allocation6], 1
    %2754 = vsyncpa [#allocation9], 1
    %2755 = vsyncpa [#allocation4], 1
    %2756 = vsyncpa [#allocation13], 1

</llo_original>
